<compile_context>
chip_gen: v7x
topology: tpu7x:2x2x1
jax: 0.10.0
libtpu: 0.0.40
codegen_flags: <defaults>
</compile_context>

<pallas_src>
import functools

import jax
import jax.numpy as jnp
from jax.experimental import pallas as pl
from jax.experimental.pallas import tpu as pltpu

EPS = 1e-5
SUBLANE = 16  # bf16 sublane packing for block-shape alignment


# ---------------------------------------------------------------------------
# Shared per-tile math
# ---------------------------------------------------------------------------
def _compute_tile(x, w1_ref, b1_ref, w2_ref, b2_ref, w3_ref, b3_ref, o_ref,
                  xcol_ref, *, K, W, TRW):
    """Fused bottleneck math for one flat row tile.

    x        : (RW, Cin) bf16, RW = TRW + (K-1)*W  (halo rows included)
    xcol_ref : (TRW, K*K*P) bf16 scratch (None when K == 1)
    o_ref    : (1, TRW, 4P) bf16 output block
    """
    P = w1_ref.shape[1]
    RW = x.shape[0]

    # conv1 (1x1) + folded bn1 + relu (halo rows included).
    h1 = jnp.dot(x, w1_ref[...], preferred_element_type=jnp.float32)
    h1 = jnp.maximum(h1 + b1_ref[...], 0.0)                  # (RW, P) f32

    # conv2 (KxK, pad=0, stride=1) as one fat matmul over the K^2 stacked taps.
    # Each tap is rolled (XLU slot), cast to bf16 and stored at a static lane
    # offset of the scratch buffer (store slot) — no lane-axis concatenate.
    # Rows wrapped by the circular roll only affect output columns c >= Wo,
    # which the wrapper crops away.
    if K == 1:
        xcol = h1[:TRW, :].astype(jnp.bfloat16)
    else:
        tap_idx = 0
        for di in range(K):
            for dj in range(K):
                shift = di * W + dj
                tap = h1 if shift == 0 else pltpu.roll(h1, RW - shift, axis=0)
                xcol_ref[:, tap_idx * P:(tap_idx + 1) * P] = (
                    tap[:TRW, :].astype(jnp.bfloat16))
                tap_idx += 1
        xcol = xcol_ref[...]                                  # (TRW, K*K*P) bf16
    h2 = jnp.dot(xcol, w2_ref[...], preferred_element_type=jnp.float32)
    h2 = jnp.maximum(h2 + b2_ref[...], 0.0)                   # (TRW, P) f32

    # conv3 (1x1) + folded bn3
    h3 = jnp.dot(h2.astype(jnp.bfloat16), w3_ref[...],
                 preferred_element_type=jnp.float32)
    h3 = h3 + b3_ref[...]                                     # (TRW, 4P) f32

    # identity residual (downsample=None -> Cin == 4P) + final relu
    res = x[:TRW, :].astype(jnp.float32)
    o_ref[0] = jnp.maximum(h3 + res, 0.0).astype(o_ref.dtype)


# ---------------------------------------------------------------------------
# Kernels
# ---------------------------------------------------------------------------
def _tiled_kernel(x_hbm, w1_ref, b1_ref, w2_ref, b2_ref, w3_ref, b3_ref, o_ref,
                  x_buf, sem, *scratch, K, W, TR, NTC, ALIGN):
    """Row-tiled path with manual double-buffered halo DMA of x.

    Grid = (batch n, segment s, tile-in-segment t).  Each (n, s) segment owns
    a contiguous range of NTC row tiles; t is sequential ("arbitrary"), so the
    double-buffer state and the prime at t == 0 are megacore-safe.
    """
    n = pl.program_id(0)
    s = pl.program_id(1)
    t = pl.program_id(2)
    TRW = TR * W                       # flat output rows per tile
    RW = (TR + K - 1) * W              # flat input rows per tile (with halo)
    xcol_ref = scratch[0] if scratch else None

    tile = s * NTC + t                 # row-tile index within image n

    def _start(tile_idx):
        off = tile_idx * TRW
        if ALIGN > 1:
            off = pl.multiple_of(off, ALIGN)
        return off

    def fetch(tile_idx, slot):
        pltpu.make_async_copy(
            x_hbm.at[n, pl.ds(_start(tile_idx), RW)],
            x_buf.at[slot], sem.at[slot]).start()

    # Prime the double buffer at the first tile of each (image, segment).
    @pl.when(t == 0)
    def _():
        fetch(tile, 0)

    slot = t % 2

    # Wait for the current tile's x, then immediately prefetch the next one.
    pltpu.make_async_copy(
        x_hbm.at[n, pl.ds(_start(tile), RW)], x_buf.at[slot], sem.at[slot]).wait()

    @pl.when(t + 1 < NTC)
    def _():
        fetch(tile + 1, 1 - slot)

    _compute_tile(x_buf[slot], w1_ref, b1_ref, w2_ref, b2_ref, w3_ref, b3_ref,
                  o_ref, xcol_ref, K=K, W=W, TRW=TRW)


def _whole_kernel(x_ref, w1_ref, b1_ref, w2_ref, b2_ref, w3_ref, b3_ref, o_ref,
                  *scratch, K, W, TRW):
    """Whole-image path: x is auto-pipelined by BlockSpec across the batch axis,
    so each image's DMA hides behind the previous image's compute."""
    xcol_ref = scratch[0] if scratch else None
    _compute_tile(x_ref[0], w1_ref, b1_ref, w2_ref, b2_ref, w3_ref, b3_ref,
                  o_ref, xcol_ref, K=K, W=W, TRW=TRW)


# ---------------------------------------------------------------------------
# Tile sizing helpers
# ---------------------------------------------------------------------------
def _vmem_limit_bytes():
    try:
        cap = int(pltpu.get_tpu_info().vmem_capacity_bytes)
    except Exception:
        cap = 64 * 1024 * 1024          # conservative: v7x per-TensorCore VMEM
    # ~8 MiB headroom for compiler-internal scratch (was 32 MiB + a //2 hedge,
    # which left only ~16 MiB of tiles on a 64 MiB v7x part).
    return max(24 * 1024 * 1024, cap - 8 * 1024 * 1024)


def _fixed_vmem_bytes(Cin, P, K):
    cout = 4 * P
    wts = (Cin * P + K * K * P * P + P * cout) * 2 + (2 * P + cout) * 4
    return 2 * wts + (1 << 20)          # (double-buffered) weight blocks + slack


def _tile_vmem_bytes(tr, W, Cin, P, K):
    """Per-grid-step VMEM footprint estimate (buffers + live intermediates)."""
    rows_in = tr + K - 1
    cout = 4 * P
    trw, rw = tr * W, rows_in * W
    x_buf = 2 * rw * Cin * 2                 # bf16 x double buffer / block
    out_buf = 2 * trw * cout * 2             # bf16 output double buffer
    h1 = 2 * rw * P * 4                      # h1 + one live rolled tap (f32)
    xcol = trw * K * K * P * 2               # bf16 im2col scratch
    tail = trw * (P + 2 * cout + Cin) * 4    # h2 / h3 / residual / relu temps
    return x_buf + out_buf + h1 + xcol + tail


def _pick_row_tile(Ho, W, Cin, P, K, budget_bytes, max_rows):
    """Largest divisor of Ho respecting bf16 sublane alignment, the VMEM budget
    and an optional row cap.  Falls back to the whole image."""
    cands = [d for d in range(1, Ho + 1)
             if Ho % d == 0 and d <= max_rows
             and (d == Ho or (d * W) % SUBLANE == 0)]
    fitting = [d for d in cands
               if _tile_vmem_bytes(d, W, Cin, P, K) <= budget_bytes]
    if fitting:
        return max(fitting)
    # TODO(synk): ragged last row tile for shapes where no aligned divisor of Ho
    # fits the VMEM budget; fall back to the smallest admissible tile for now.
    if cands:
        return min(cands, key=lambda d: _tile_vmem_bytes(d, W, Cin, P, K))
    return Ho


# ---------------------------------------------------------------------------
# Wrapper
# ---------------------------------------------------------------------------
def bottleneck_forward(x_nchw, params, *, kernel_size, stride=1,
                       max_tile_rows=None, out_dtype=jnp.float32):
    """BagNet Bottleneck forward (stride=1, downsample=None path)."""
    # TODO(synk): strided conv2 + downsample branch not implemented (not used by
    # the default BagNet bottleneck configuration).
    assert stride == 1
    N, Cin, H, W = x_nchw.shape
    K = kernel_size
    assert H >= K and W >= K
    Ho, Wo = H - K + 1, W - K + 1
    P = params["w1"].shape[1]
    Cout = 4 * P
    assert Cin == Cout, "identity residual requires inplanes == planes*4"
    assert params["w2"].shape == (K * K * P, P)

    vmem_limit = _vmem_limit_bytes()
    budget = max(vmem_limit - _fixed_vmem_bytes(Cin, P, K), 1)
    TR = _pick_row_tile(Ho, W, Cin, P, K, budget_bytes=budget,
                        max_rows=max_tile_rows or Ho)
    NT = Ho // TR
    TRW = TR * W

    # Layout glue: NCHW f32 -> (N, H*W, C) channels-last bf16 for the MXU.
    # This is a full extra HBM pass; a channels-last bf16 upstream pipeline
    # would hand x over directly and should skip it.
    x_flat = (jnp.transpose(x_nchw, (0, 2, 3, 1))
              .reshape(N, H * W, Cin).astype(jnp.bfloat16))

    xcol_scratch = ([pltpu.VMEM((TRW, K * K * P), jnp.bfloat16)] if K > 1 else [])
    args = (x_flat, params["w1"], params["b1"], params["w2"], params["b2"],
            params["w3"], params["b3"])

    if NT == 1:
        # Whole image per grid step: BlockSpec auto-pipelines x across the
        # batch axis (each image's load is hidden behind the previous compute).
        kernel = functools.partial(_whole_kernel, K=K, W=W, TRW=Ho * W)
        out_flat = pl.pallas_call(
            kernel,
            out_shape=jax.ShapeDtypeStruct((N, Ho * W, Cout), jnp.bfloat16),
            grid=(N,),
            in_specs=[
                pl.BlockSpec((1, H * W, Cin), lambda n: (n, 0, 0)),       # x
                pl.BlockSpec((Cin, P), lambda n: (0, 0)),                 # w1
                pl.BlockSpec((1, P), lambda n: (0, 0)),                   # b1
                pl.BlockSpec((K * K * P, P), lambda n: (0, 0)),           # w2
                pl.BlockSpec((1, P), lambda n: (0, 0)),                   # b2
                pl.BlockSpec((P, Cout), lambda n: (0, 0)),                # w3
                pl.BlockSpec((1, Cout), lambda n: (0, 0)),                # b3
            ],
            out_specs=pl.BlockSpec((1, Ho * W, Cout), lambda n: (n, 0, 0)),
            scratch_shapes=xcol_scratch,
            compiler_params=pltpu.CompilerParams(
                dimension_semantics=("parallel",),
                vmem_limit_bytes=vmem_limit,
            ),
        )(*args)
    else:
        # Split the row-tile range into S parallel segments so both v7x
        # TensorCores get work even when the batch alone can't feed them.
        S = 2 if (N % 2 == 1 and NT % 2 == 0) else 1
        NTC = NT // S
        ALIGN = min(TRW & (-TRW), 512)       # largest pow2 dividing TRW (hint)
        ROWS_IN = TR + K - 1
        kernel = functools.partial(_tiled_kernel, K=K, W=W, TR=TR, NTC=NTC,
                                   ALIGN=ALIGN)
        out_flat = pl.pallas_call(
            kernel,
            out_shape=jax.ShapeDtypeStruct((N, Ho * W, Cout), jnp.bfloat16),
            grid=(N, S, NTC),
            in_specs=[
                pl.BlockSpec(memory_space=pl.ANY),                        # x (manual halo DMA)
                pl.BlockSpec((Cin, P), lambda n, s, t: (0, 0)),           # w1 (bn1 folded)
                pl.BlockSpec((1, P), lambda n, s, t: (0, 0)),             # b1
                pl.BlockSpec((K * K * P, P), lambda n, s, t: (0, 0)),     # w2 (tap-major)
                pl.BlockSpec((1, P), lambda n, s, t: (0, 0)),             # b2
                pl.BlockSpec((P, Cout), lambda n, s, t: (0, 0)),          # w3 (bn3 folded)
                pl.BlockSpec((1, Cout), lambda n, s, t: (0, 0)),          # b3
            ],
            out_specs=pl.BlockSpec((1, TRW, Cout),
                                   lambda n, s, t: (n, s * NTC + t, 0)),
            scratch_shapes=[
                pltpu.VMEM((2, ROWS_IN * W, Cin), jnp.bfloat16),          # x double buffer
                pltpu.SemaphoreType.DMA((2,)),
            ] + xcol_scratch,
            compiler_params=pltpu.CompilerParams(
                # The tile axis carries the manual-DMA double-buffer state,
                # so it stays sequential; batch/segment axes shard across cores.
                dimension_semantics=("parallel", "parallel", "arbitrary"),
                vmem_limit_bytes=vmem_limit,
            ),
        )(*args)

    # Crop the K-1 right-border columns (they hold wrapped-tap garbage) and
    # return NCHW.  Crop + transpose run in bf16; cast only at the interface.
    out = out_flat.reshape(N, Ho, W, Cout)[:, :, :Wo, :]
    return jnp.transpose(out, (0, 3, 1, 2)).astype(out_dtype)


# ---------------------------------------------------------------------------
# Parameters / reference
# ---------------------------------------------------------------------------
def init_params(key, inplanes, planes, kernel_size):
    """Deterministic synthetic parameters in PyTorch layouts (OIHW + BN vectors)."""
    K = kernel_size
    keys = jax.random.split(key, 6)

    def w(k, shape, fan_in):
        return jax.random.normal(k, shape, jnp.float32) / jnp.sqrt(fan_in)

    def bn(k, c):
        k1, k2, k3, k4 = jax.random.split(k, 4)
        g = jax.random.uniform(k1, (c,), jnp.float32, 0.5, 1.5)
        b = jax.random.normal(k2, (c,), jnp.float32) * 0.1
        m = jax.random.normal(k3, (c,), jnp.float32) * 0.1
        v = jax.random.uniform(k4, (c,), jnp.float32, 0.5, 1.5)
        return g, b, m, v

    return dict(
        w1_oihw=w(keys[0], (planes, inplanes, 1, 1), inplanes),
        w2_oihw=w(keys[1], (planes, planes, K, K), planes * K * K),
        w3_oihw=w(keys[2], (planes * 4, planes, 1, 1), planes),
        bn1=bn(keys[3], planes),
        bn2=bn(keys[4], planes),
        bn3=bn(keys[5], planes * 4),
    )


def fold_for_kernel(pt):
    """Fold eval-mode BN scale into the conv weights (bias kept separate) and
    cast to the bf16 matmul layouts the kernel expects."""
    def fold(bn):
        g, b, m, v = bn
        s = g / jnp.sqrt(v + EPS)
        return s, b - m * s

    s1, b1 = fold(pt["bn1"])
    s2, b2 = fold(pt["bn2"])
    s3, b3 = fold(pt["bn3"])

    P = pt["w1_oihw"].shape[0]
    K = pt["w2_oihw"].shape[-1]

    w1 = jnp.transpose(pt["w1_oihw"][:, :, 0, 0], (1, 0)) * s1[None, :]        # (Cin, P)
    w2 = jnp.transpose(pt["w2_oihw"], (2, 3, 1, 0)) * s2[None, None, None, :]  # (K,K,In,Out)
    w2 = w2.reshape(K * K * P, P)                                              # tap-major
    w3 = jnp.transpose(pt["w3_oihw"][:, :, 0, 0], (1, 0)) * s3[None, :]        # (P, 4P)

    return dict(
        w1=w1.astype(jnp.bfloat16), b1=b1[None, :].astype(jnp.float32),
        w2=w2.astype(jnp.bfloat16), b2=b2[None, :].astype(jnp.float32),
        w3=w3.astype(jnp.bfloat16), b3=b3[None, :].astype(jnp.float32),
    )


def reference_forward(x_nchw, pt, kernel_size):
    """Pure-JAX f32 reference with PyTorch (eval-mode BN) semantics, NCHW."""
    def bn(y, p):
        g, b, m, v = (t[None, :, None, None] for t in p)
        return (y - m) / jnp.sqrt(v + EPS) * g + b

    def conv(y, w, stride=1):
        return jax.lax.conv_general_dilated(
            y, w, (stride, stride), "VALID",
            dimension_numbers=("NCHW", "OIHW", "NCHW"),
            precision=jax.lax.Precision.HIGHEST)

    out = jax.nn.relu(bn(conv(x_nchw, pt["w1_oihw"]), pt["bn1"]))
    out = jax.nn.relu(bn(conv(out, pt["w2_oihw"]), pt["bn2"]))
    out = bn(conv(out, pt["w3_oihw"]), pt["bn3"])
    Ho, Wo = out.shape[2], out.shape[3]
    residual = x_nchw[:, :, :Ho, :Wo]      # same as residual[:, :, :-diff, :-diff]
    return jax.nn.relu(out + residual)


if __name__ == "__main__":
    key = jax.random.PRNGKey(0)
    kx, kkey3, kkey1 = jax.random.split(key, 3)

    # inplanes == planes*4 -> identity residual; Cout=128 keeps output lane-dense.
    N, inplanes, planes, H = 2, 128, 32, 16
    x = jax.random.normal(kx, (N, inplanes, H, H), jnp.float32)

    def check(out, ref):
        assert out.shape == ref.shape, (out.shape, ref.shape)
        err = float(jnp.max(jnp.abs(out - ref)))
        # bf16 MXU operands + bf16 output with f32 accumulation -> relaxed tol.
        assert jnp.allclose(out, ref, atol=1e-1, rtol=5e-2), f"max abs err {err}"

    # kernel_size=3: row-tiled halo-DMA path and whole-image auto-pipelined path.
    K = 3
    pt3 = init_params(kkey3, inplanes, planes, K)
    fold3 = fold_for_kernel(pt3)
    ref3 = reference_forward(x, pt3, K)
    out_tiled = jax.block_until_ready(
        bottleneck_forward(x, fold3, kernel_size=K, max_tile_rows=7))   # 2 row tiles
    out_full = jax.block_until_ready(
        bottleneck_forward(x, fold3, kernel_size=K))                    # whole image
    check(out_tiled, ref3)
    check(out_full, ref3)

    # N=1: exercises the 2-way row-tile segment split (v7x both-cores path).
    x1 = x[:1]
    ref3_1 = reference_forward(x1, pt3, K)
    out_split = jax.block_until_ready(
        bottleneck_forward(x1, fold3, kernel_size=K, max_tile_rows=1))  # NT=14, S=2
    check(out_split, ref3_1)

    # kernel_size=1 (module default): degenerate conv2, row-tiled.
    K = 1
    pt1 = init_params(kkey1, inplanes, planes, K)
    fold1 = fold_for_kernel(pt1)
    ref1 = reference_forward(x, pt1, K)
    out_k1 = jax.block_until_ready(
        bottleneck_forward(x, fold1, kernel_size=K, max_tile_rows=8))   # 2 row tiles
    check(out_k1, ref1)

    print("KERNEL_OK")
</pallas_src>

<mosaic_0001>
module attributes {stable_mosaic.version = 11 : i64} {
  func.func @_tiled_kernel(%arg0: i32, %arg1: i32, %arg2: i32, %arg3: memref<2x256x128xbf16, #tpu.memory_space<any>>, %arg4: memref<128x32xbf16, #tpu.memory_space<vmem>>, %arg5: memref<1x32xf32, #tpu.memory_space<vmem>>, %arg6: memref<288x32xbf16, #tpu.memory_space<vmem>>, %arg7: memref<1x32xf32, #tpu.memory_space<vmem>>, %arg8: memref<32x128xbf16, #tpu.memory_space<vmem>>, %arg9: memref<1x128xf32, #tpu.memory_space<vmem>>, %arg10: memref<1x112x128xbf16, #tpu.memory_space<vmem>>, %arg11: memref<2x144x128xbf16, #tpu.memory_space<vmem>>, %arg12: memref<2x!tpu.dma_semaphore, #tpu.memory_space<semaphore_mem>>, %arg13: memref<112x288xbf16, #tpu.memory_space<vmem>>) attributes {dimension_semantics = [#tpu.dimension_semantics<parallel>, #tpu.dimension_semantics<parallel>, #tpu.dimension_semantics<arbitrary>], iteration_bounds = array<i64: 2, 1, 2>, scalar_prefetch = 0 : i64, scratch_operands = 3 : i64, tpu.core_type = #tpu.core_type<tc>, window_params = [{}, {pipeline_mode = #tpu.pipeline_mode<synchronous>, transform_indices = @transform_1, window_bounds = array<i64: 128, 32>}, {pipeline_mode = #tpu.pipeline_mode<synchronous>, transform_indices = @transform_2, window_bounds = array<i64: 1, 32>}, {pipeline_mode = #tpu.pipeline_mode<synchronous>, transform_indices = @transform_3, window_bounds = array<i64: 288, 32>}, {pipeline_mode = #tpu.pipeline_mode<synchronous>, transform_indices = @transform_4, window_bounds = array<i64: 1, 32>}, {pipeline_mode = #tpu.pipeline_mode<synchronous>, transform_indices = @transform_5, window_bounds = array<i64: 32, 128>}, {pipeline_mode = #tpu.pipeline_mode<synchronous>, transform_indices = @transform_6, window_bounds = array<i64: 1, 128>}, {transform_indices = @transform_7, window_bounds = array<i64: 1, 112, 128>}]} {
    %c2_i32 = arith.constant 2 : i32
    %0 = arith.muli %arg1, %c2_i32 : i32
    %1 = arith.addi %0, %arg2 : i32
    %c0_i32 = arith.constant 0 : i32
    %2 = arith.cmpi eq, %arg2, %c0_i32 : i32
    %3 = arith.extui %2 : i1 to i32
    %c0_i32_0 = arith.constant 0 : i32
    %4 = arith.cmpi ne, %3, %c0_i32_0 : i32
    scf.if %4 {
      %c112_i32_46 = arith.constant 112 : i32
      %95 = arith.muli %1, %c112_i32_46 : i32
      %96 = tpu.assume_multiple %95, 16 : i32
      %c0_i32_47 = arith.constant 0 : i32
      %c0_i32_48 = arith.constant 0 : i32
      %c0_i32_49 = arith.constant 0 : i32
      %97 = tpu.memref_slice %arg3[%arg0, %96, %c0_i32_49] : memref<2x256x128xbf16, #tpu.memory_space<any>> -> memref<1x144x128xbf16, #tpu.memory_space<any>>
      %98 = tpu.memref_squeeze %97 : memref<1x144x128xbf16, #tpu.memory_space<any>> -> memref<144x128xbf16, #tpu.memory_space<any>>
      %c0_i32_50 = arith.constant 0 : i32
      %c0_i32_51 = arith.constant 0 : i32
      %99 = tpu.memref_slice %arg11[%c0_i32_47, %c0_i32_50, %c0_i32_51] : memref<2x144x128xbf16, #tpu.memory_space<vmem>> -> memref<1x144x128xbf16, #tpu.memory_space<vmem>>
      %100 = tpu.memref_squeeze %99 : memref<1x144x128xbf16, #tpu.memory_space<vmem>> -> memref<144x128xbf16, #tpu.memory_space<vmem>>
      %101 = tpu.memref_slice %arg12[%c0_i32_48] : memref<2x!tpu.dma_semaphore, #tpu.memory_space<semaphore_mem>> -> memref<1x!tpu.dma_semaphore, #tpu.memory_space<semaphore_mem>>
      %102 = tpu.memref_squeeze %101 : memref<1x!tpu.dma_semaphore, #tpu.memory_space<semaphore_mem>> -> memref<!tpu.dma_semaphore, #tpu.memory_space<semaphore_mem>>
      tpu.enqueue_dma source(%98 : memref<144x128xbf16, #tpu.memory_space<any>>) target(%100 : memref<144x128xbf16, #tpu.memory_space<vmem>>) target_semaphore(%102 : memref<!tpu.dma_semaphore, #tpu.memory_space<semaphore_mem>>)
    } else {
    }
    %c2_i32_1 = arith.constant 2 : i32
    %c0_i32_2 = arith.constant 0 : i32
    %5 = arith.cmpi eq, %c2_i32_1, %c0_i32_2 : i32
    %c1_i32 = arith.constant 1 : i32
    %6 = arith.select %5, %c1_i32, %c2_i32_1 : i32
    %7 = arith.remsi %arg2, %6 : i32
    %c0_i32_3 = arith.constant 0 : i32
    %8 = arith.cmpi ne, %7, %c0_i32_3 : i32
    %c0_i32_4 = arith.constant 0 : i32
    %9 = arith.cmpi slt, %7, %c0_i32_4 : i32
    %c0_i32_5 = arith.constant 0 : i32
    %10 = arith.cmpi slt, %6, %c0_i32_5 : i32
    %11 = arith.xori %9, %10 : i1
    %12 = arith.andi %11, %8 : i1
    %13 = arith.addi %7, %6 : i32
    %14 = arith.select %12, %13, %7 : i32
    %c112_i32 = arith.constant 112 : i32
    %15 = arith.muli %1, %c112_i32 : i32
    %16 = tpu.assume_multiple %15, 16 : i32
    %c0_i32_6 = arith.constant 0 : i32
    %17 = tpu.memref_slice %arg3[%arg0, %16, %c0_i32_6] : memref<2x256x128xbf16, #tpu.memory_space<any>> -> memref<1x144x128xbf16, #tpu.memory_space<any>>
    %18 = tpu.memref_squeeze %17 : memref<1x144x128xbf16, #tpu.memory_space<any>> -> memref<144x128xbf16, #tpu.memory_space<any>>
    %c0_i32_7 = arith.constant 0 : i32
    %c0_i32_8 = arith.constant 0 : i32
    %19 = tpu.memref_slice %arg11[%14, %c0_i32_7, %c0_i32_8] : memref<2x144x128xbf16, #tpu.memory_space<vmem>> -> memref<1x144x128xbf16, #tpu.memory_space<vmem>>
    %20 = tpu.memref_squeeze %19 : memref<1x144x128xbf16, #tpu.memory_space<vmem>> -> memref<144x128xbf16, #tpu.memory_space<vmem>>
    %21 = tpu.memref_slice %arg12[%14] : memref<2x!tpu.dma_semaphore, #tpu.memory_space<semaphore_mem>> -> memref<1x!tpu.dma_semaphore, #tpu.memory_space<semaphore_mem>>
    %22 = tpu.memref_squeeze %21 : memref<1x!tpu.dma_semaphore, #tpu.memory_space<semaphore_mem>> -> memref<!tpu.dma_semaphore, #tpu.memory_space<semaphore_mem>>
    tpu.wait_dma2 semaphore(%22 : memref<!tpu.dma_semaphore, #tpu.memory_space<semaphore_mem>>) src(%18 : memref<144x128xbf16, #tpu.memory_space<any>>) dst(%20 : memref<144x128xbf16, #tpu.memory_space<vmem>>)
    %c1_i32_9 = arith.constant 1 : i32
    %23 = arith.addi %arg2, %c1_i32_9 : i32
    %c2_i32_10 = arith.constant 2 : i32
    %24 = arith.cmpi slt, %23, %c2_i32_10 : i32
    %25 = arith.extui %24 : i1 to i32
    %c0_i32_11 = arith.constant 0 : i32
    %26 = arith.cmpi ne, %25, %c0_i32_11 : i32
    scf.if %26 {
      %c1_i32_46 = arith.constant 1 : i32
      %95 = arith.addi %1, %c1_i32_46 : i32
      %c1_i32_47 = arith.constant 1 : i32
      %96 = arith.subi %c1_i32_47, %14 : i32
      %c112_i32_48 = arith.constant 112 : i32
      %97 = arith.muli %95, %c112_i32_48 : i32
      %98 = tpu.assume_multiple %97, 16 : i32
      %c0_i32_49 = arith.constant 0 : i32
      %99 = tpu.memref_slice %arg3[%arg0, %98, %c0_i32_49] : memref<2x256x128xbf16, #tpu.memory_space<any>> -> memref<1x144x128xbf16, #tpu.memory_space<any>>
      %100 = tpu.memref_squeeze %99 : memref<1x144x128xbf16, #tpu.memory_space<any>> -> memref<144x128xbf16, #tpu.memory_space<any>>
      %c0_i32_50 = arith.constant 0 : i32
      %c0_i32_51 = arith.constant 0 : i32
      %101 = tpu.memref_slice %arg11[%96, %c0_i32_50, %c0_i32_51] : memref<2x144x128xbf16, #tpu.memory_space<vmem>> -> memref<1x144x128xbf16, #tpu.memory_space<vmem>>
      %102 = tpu.memref_squeeze %101 : memref<1x144x128xbf16, #tpu.memory_space<vmem>> -> memref<144x128xbf16, #tpu.memory_space<vmem>>
      %103 = tpu.memref_slice %arg12[%96] : memref<2x!tpu.dma_semaphore, #tpu.memory_space<semaphore_mem>> -> memref<1x!tpu.dma_semaphore, #tpu.memory_space<semaphore_mem>>
      %104 = tpu.memref_squeeze %103 : memref<1x!tpu.dma_semaphore, #tpu.memory_space<semaphore_mem>> -> memref<!tpu.dma_semaphore, #tpu.memory_space<semaphore_mem>>
      tpu.enqueue_dma source(%100 : memref<144x128xbf16, #tpu.memory_space<any>>) target(%102 : memref<144x128xbf16, #tpu.memory_space<vmem>>) target_semaphore(%104 : memref<!tpu.dma_semaphore, #tpu.memory_space<semaphore_mem>>)
    } else {
    }
    %27 = arith.index_cast %14 : i32 to index
    %c0 = arith.constant 0 : index
    %c0_12 = arith.constant 0 : index
    %28 = vector.load %arg11[%27, %c0, %c0_12] : memref<2x144x128xbf16, #tpu.memory_space<vmem>>, vector<1x144x128xbf16>
    %29 = vector.shape_cast %28 : vector<1x144x128xbf16> to vector<144x128xbf16>
    %c0_13 = arith.constant 0 : index
    %c0_14 = arith.constant 0 : index
    %30 = vector.load %arg4[%c0_13, %c0_14] : memref<128x32xbf16, #tpu.memory_space<vmem>>, vector<128x32xbf16>
    %cst = arith.constant dense<0.000000e+00> : vector<144x32xf32>
    %31 = tpu.matmul %29, %30, %cst {dimension_numbers = #tpu.dot_dimension_numbers<[1], [0], [0], [1], [0, 0, 1, 1], [], []>} : vector<144x128xbf16>, vector<128x32xbf16>, vector<144x32xf32> -> vector<144x32xf32>
    %c0_15 = arith.constant 0 : index
    %c0_16 = arith.constant 0 : index
    %32 = vector.load %arg5[%c0_15, %c0_16] : memref<1x32xf32, #tpu.memory_space<vmem>>, vector<1x32xf32>
    %33 = vector.broadcast %32 : vector<1x32xf32> to vector<144x32xf32>
    %34 = arith.addf %31, %33 : vector<144x32xf32>
    %cst_17 = arith.constant 0.000000e+00 : f32
    %35 = vector.broadcast %cst_17 : f32 to vector<144x32xf32>
    %36 = arith.maximumf %34, %35 : vector<144x32xf32>
    %37 = vector.extract_strided_slice %36 {offsets = [0, 0], sizes = [112, 32], strides = [1, 1]} : vector<144x32xf32> to vector<112x32xf32>
    %38 = arith.truncf %37 : vector<112x32xf32> to vector<112x32xbf16>
    %c0_18 = arith.constant 0 : index
    %c0_19 = arith.constant 0 : index
    %39 = vector.load %arg13[%c0_18, %c0_19] : memref<112x288xbf16, #tpu.memory_space<vmem>>, vector<112x32xbf16>
    tpu.vector_store %arg13[%c0_18, %c0_19], %38 {strides = array<i32>} : memref<112x288xbf16, #tpu.memory_space<vmem>>, vector<112x32xbf16>,
    %c143_i32 = arith.constant 143 : i32
    %40 = tpu.dynamic_rotate %36 by %c143_i32 dim 0 : vector<144x32xf32>, i32 -> vector<144x32xf32>
    %41 = vector.extract_strided_slice %40 {offsets = [0, 0], sizes = [112, 32], strides = [1, 1]} : vector<144x32xf32> to vector<112x32xf32>
    %42 = arith.truncf %41 : vector<112x32xf32> to vector<112x32xbf16>
    %c0_20 = arith.constant 0 : index
    %c32 = arith.constant 32 : index
    %43 = vector.load %arg13[%c0_20, %c32] : memref<112x288xbf16, #tpu.memory_space<vmem>>, vector<112x32xbf16>
    tpu.vector_store %arg13[%c0_20, %c32], %42 {strides = array<i32>} : memref<112x288xbf16, #tpu.memory_space<vmem>>, vector<112x32xbf16>,
    %c142_i32 = arith.constant 142 : i32
    %44 = tpu.dynamic_rotate %36 by %c142_i32 dim 0 : vector<144x32xf32>, i32 -> vector<144x32xf32>
    %45 = vector.extract_strided_slice %44 {offsets = [0, 0], sizes = [112, 32], strides = [1, 1]} : vector<144x32xf32> to vector<112x32xf32>
    %46 = arith.truncf %45 : vector<112x32xf32> to vector<112x32xbf16>
    %c0_21 = arith.constant 0 : index
    %c64 = arith.constant 64 : index
    %47 = vector.load %arg13[%c0_21, %c64] : memref<112x288xbf16, #tpu.memory_space<vmem>>, vector<112x32xbf16>
    tpu.vector_store %arg13[%c0_21, %c64], %46 {strides = array<i32>} : memref<112x288xbf16, #tpu.memory_space<vmem>>, vector<112x32xbf16>,
    %c128_i32 = arith.constant 128 : i32
    %48 = tpu.dynamic_rotate %36 by %c128_i32 dim 0 : vector<144x32xf32>, i32 -> vector<144x32xf32>
    %49 = vector.extract_strided_slice %48 {offsets = [0, 0], sizes = [112, 32], strides = [1, 1]} : vector<144x32xf32> to vector<112x32xf32>
    %50 = arith.truncf %49 : vector<112x32xf32> to vector<112x32xbf16>
    %c0_22 = arith.constant 0 : index
    %c96 = arith.constant 96 : index
    %51 = vector.load %arg13[%c0_22, %c96] : memref<112x288xbf16, #tpu.memory_space<vmem>>, vector<112x32xbf16>
    tpu.vector_store %arg13[%c0_22, %c96], %50 {strides = array<i32>} : memref<112x288xbf16, #tpu.memory_space<vmem>>, vector<112x32xbf16>,
    %c127_i32 = arith.constant 127 : i32
    %52 = tpu.dynamic_rotate %36 by %c127_i32 dim 0 : vector<144x32xf32>, i32 -> vector<144x32xf32>
    %53 = vector.extract_strided_slice %52 {offsets = [0, 0], sizes = [112, 32], strides = [1, 1]} : vector<144x32xf32> to vector<112x32xf32>
    %54 = arith.truncf %53 : vector<112x32xf32> to vector<112x32xbf16>
    %c0_23 = arith.constant 0 : index
    %c128 = arith.constant 128 : index
    %55 = vector.load %arg13[%c0_23, %c128] : memref<112x288xbf16, #tpu.memory_space<vmem>>, vector<112x32xbf16>
    tpu.vector_store %arg13[%c0_23, %c128], %54 {strides = array<i32>} : memref<112x288xbf16, #tpu.memory_space<vmem>>, vector<112x32xbf16>,
    %c126_i32 = arith.constant 126 : i32
    %56 = tpu.dynamic_rotate %36 by %c126_i32 dim 0 : vector<144x32xf32>, i32 -> vector<144x32xf32>
    %57 = vector.extract_strided_slice %56 {offsets = [0, 0], sizes = [112, 32], strides = [1, 1]} : vector<144x32xf32> to vector<112x32xf32>
    %58 = arith.truncf %57 : vector<112x32xf32> to vector<112x32xbf16>
    %c0_24 = arith.constant 0 : index
    %c160 = arith.constant 160 : index
    %59 = vector.load %arg13[%c0_24, %c160] : memref<112x288xbf16, #tpu.memory_space<vmem>>, vector<112x32xbf16>
    tpu.vector_store %arg13[%c0_24, %c160], %58 {strides = array<i32>} : memref<112x288xbf16, #tpu.memory_space<vmem>>, vector<112x32xbf16>,
    %c112_i32_25 = arith.constant 112 : i32
    %60 = tpu.dynamic_rotate %36 by %c112_i32_25 dim 0 : vector<144x32xf32>, i32 -> vector<144x32xf32>
    %61 = vector.extract_strided_slice %60 {offsets = [0, 0], sizes = [112, 32], strides = [1, 1]} : vector<144x32xf32> to vector<112x32xf32>
    %62 = arith.truncf %61 : vector<112x32xf32> to vector<112x32xbf16>
    %c0_26 = arith.constant 0 : index
    %c192 = arith.constant 192 : index
    %63 = vector.load %arg13[%c0_26, %c192] : memref<112x288xbf16, #tpu.memory_space<vmem>>, vector<112x32xbf16>
    tpu.vector_store %arg13[%c0_26, %c192], %62 {strides = array<i32>} : memref<112x288xbf16, #tpu.memory_space<vmem>>, vector<112x32xbf16>,
    %c111_i32 = arith.constant 111 : i32
    %64 = tpu.dynamic_rotate %36 by %c111_i32 dim 0 : vector<144x32xf32>, i32 -> vector<144x32xf32>
    %65 = vector.extract_strided_slice %64 {offsets = [0, 0], sizes = [112, 32], strides = [1, 1]} : vector<144x32xf32> to vector<112x32xf32>
    %66 = arith.truncf %65 : vector<112x32xf32> to vector<112x32xbf16>
    %c0_27 = arith.constant 0 : index
    %c224 = arith.constant 224 : index
    %67 = vector.load %arg13[%c0_27, %c224] : memref<112x288xbf16, #tpu.memory_space<vmem>>, vector<112x32xbf16>
    tpu.vector_store %arg13[%c0_27, %c224], %66 {strides = array<i32>} : memref<112x288xbf16, #tpu.memory_space<vmem>>, vector<112x32xbf16>,
    %c110_i32 = arith.constant 110 : i32
    %68 = tpu.dynamic_rotate %36 by %c110_i32 dim 0 : vector<144x32xf32>, i32 -> vector<144x32xf32>
    %69 = vector.extract_strided_slice %68 {offsets = [0, 0], sizes = [112, 32], strides = [1, 1]} : vector<144x32xf32> to vector<112x32xf32>
    %70 = arith.truncf %69 : vector<112x32xf32> to vector<112x32xbf16>
    %c0_28 = arith.constant 0 : index
    %c256 = arith.constant 256 : index
    %71 = vector.load %arg13[%c0_28, %c256] : memref<112x288xbf16, #tpu.memory_space<vmem>>, vector<112x32xbf16>
    tpu.vector_store %arg13[%c0_28, %c256], %70 {strides = array<i32>} : memref<112x288xbf16, #tpu.memory_space<vmem>>, vector<112x32xbf16>,
    %c0_29 = arith.constant 0 : index
    %c0_30 = arith.constant 0 : index
    %72 = vector.load %arg13[%c0_29, %c0_30] : memref<112x288xbf16, #tpu.memory_space<vmem>>, vector<112x288xbf16>
    %c0_31 = arith.constant 0 : index
    %c0_32 = arith.constant 0 : index
    %73 = vector.load %arg6[%c0_31, %c0_32] : memref<288x32xbf16, #tpu.memory_space<vmem>>, vector<288x32xbf16>
    %cst_33 = arith.constant dense<0.000000e+00> : vector<112x32xf32>
    %74 = tpu.matmul %72, %73, %cst_33 {dimension_numbers = #tpu.dot_dimension_numbers<[1], [0], [0], [1], [0, 0, 1, 1], [], []>} : vector<112x288xbf16>, vector<288x32xbf16>, vector<112x32xf32> -> vector<112x32xf32>
    %c0_34 = arith.constant 0 : index
    %c0_35 = arith.constant 0 : index
    %75 = vector.load %arg7[%c0_34, %c0_35] : memref<1x32xf32, #tpu.memory_space<vmem>>, vector<1x32xf32>
    %76 = vector.broadcast %75 : vector<1x32xf32> to vector<112x32xf32>
    %77 = arith.addf %74, %76 : vector<112x32xf32>
    %cst_36 = arith.constant 0.000000e+00 : f32
    %78 = vector.broadcast %cst_36 : f32 to vector<112x32xf32>
    %79 = arith.maximumf %77, %78 : vector<112x32xf32>
    %80 = arith.truncf %79 : vector<112x32xf32> to vector<112x32xbf16>
    %c0_37 = arith.constant 0 : index
    %c0_38 = arith.constant 0 : index
    %81 = vector.load %arg8[%c0_37, %c0_38] : memref<32x128xbf16, #tpu.memory_space<vmem>>, vector<32x128xbf16>
    %cst_39 = arith.constant dense<0.000000e+00> : vector<112x128xf32>
    %82 = tpu.matmul %80, %81, %cst_39 {dimension_numbers = #tpu.dot_dimension_numbers<[1], [0], [0], [1], [0, 0, 1, 1], [], []>} : vector<112x32xbf16>, vector<32x128xbf16>, vector<112x128xf32> -> vector<112x128xf32>
    %c0_40 = arith.constant 0 : index
    %c0_41 = arith.constant 0 : index
    %83 = vector.load %arg9[%c0_40, %c0_41] : memref<1x128xf32, #tpu.memory_space<vmem>>, vector<1x128xf32>
    %84 = vector.broadcast %83 : vector<1x128xf32> to vector<112x128xf32>
    %85 = arith.addf %82, %84 : vector<112x128xf32>
    %86 = vector.extract_strided_slice %29 {offsets = [0, 0], sizes = [112, 128], strides = [1, 1]} : vector<144x128xbf16> to vector<112x128xbf16>
    %87 = arith.extf %86 : vector<112x128xbf16> to vector<112x128xf32>
    %88 = arith.addf %85, %87 : vector<112x128xf32>
    %cst_42 = arith.constant 0.000000e+00 : f32
    %89 = vector.broadcast %cst_42 : f32 to vector<112x128xf32>
    %90 = arith.maximumf %88, %89 : vector<112x128xf32>
    %91 = arith.truncf %90 : vector<112x128xf32> to vector<112x128xbf16>
    %c0_43 = arith.constant 0 : index
    %c0_44 = arith.constant 0 : index
    %c0_45 = arith.constant 0 : index
    %92 = vector.load %arg10[%c0_43, %c0_44, %c0_45] : memref<1x112x128xbf16, #tpu.memory_space<vmem>>, vector<1x112x128xbf16>
    %93 = vector.shape_cast %92 : vector<1x112x128xbf16> to vector<112x128xbf16>
    %94 = vector.shape_cast %91 : vector<112x128xbf16> to vector<1x112x128xbf16>
    tpu.vector_store %arg10[%c0_43, %c0_44, %c0_45], %94 {strides = array<i32>} : memref<1x112x128xbf16, #tpu.memory_space<vmem>>, vector<1x112x128xbf16>,
    return
  }
  func.func @transform_1(%arg0: i32, %arg1: i32, %arg2: i32) -> (i32, i32) {
    %c0_i32 = arith.constant 0 : i32
    %c0_i32_0 = arith.constant 0 : i32
    %c0_i32_1 = arith.constant 0 : i32
    return %c0_i32, %c0_i32_0 : i32, i32
  }
  func.func @transform_2(%arg0: i32, %arg1: i32, %arg2: i32) -> (i32, i32) {
    %c0_i32 = arith.constant 0 : i32
    %c0_i32_0 = arith.constant 0 : i32
    %c0_i32_1 = arith.constant 0 : i32
    return %c0_i32, %c0_i32_0 : i32, i32
  }
  func.func @transform_3(%arg0: i32, %arg1: i32, %arg2: i32) -> (i32, i32) {
    %c0_i32 = arith.constant 0 : i32
    %c0_i32_0 = arith.constant 0 : i32
    %c0_i32_1 = arith.constant 0 : i32
    return %c0_i32, %c0_i32_0 : i32, i32
  }
  func.func @transform_4(%arg0: i32, %arg1: i32, %arg2: i32) -> (i32, i32) {
    %c0_i32 = arith.constant 0 : i32
    %c0_i32_0 = arith.constant 0 : i32
    %c0_i32_1 = arith.constant 0 : i32
    return %c0_i32, %c0_i32_0 : i32, i32
  }
  func.func @transform_5(%arg0: i32, %arg1: i32, %arg2: i32) -> (i32, i32) {
    %c0_i32 = arith.constant 0 : i32
    %c0_i32_0 = arith.constant 0 : i32
    %c0_i32_1 = arith.constant 0 : i32
    return %c0_i32, %c0_i32_0 : i32, i32
  }
  func.func @transform_6(%arg0: i32, %arg1: i32, %arg2: i32) -> (i32, i32) {
    %c0_i32 = arith.constant 0 : i32
    %c0_i32_0 = arith.constant 0 : i32
    %c0_i32_1 = arith.constant 0 : i32
    return %c0_i32, %c0_i32_0 : i32, i32
  }
  func.func @transform_7(%arg0: i32, %arg1: i32, %arg2: i32) -> (i32, i32, i32) {
    %c2_i32 = arith.constant 2 : i32
    %0 = arith.muli %arg1, %c2_i32 : i32
    %1 = arith.addi %0, %arg2 : i32
    %c0_i32 = arith.constant 0 : i32
    %c0_i32_0 = arith.constant 0 : i32
    return %arg0, %1, %c0_i32 : i32, i32, i32
  }
}

</mosaic_0001>

<llo_original>
// kernel: tpu_custom_call.1
$region0: #{tpu_custom_call.1}
  #allocation0 [shape = 'u32[]', space=smem, size = 0x4, offset = 0x4, fixed_abs, tag = 'smem constant byte address 0x4 - core index']
  #allocation1 [shape = 'u32[144,128]{1,0:T(1,128)}', space=vmem, size = 0x12000, scoped, tag = 'internal scratch']
  #allocation2 [shape = 'bf16[2,144,128]{2,1,0:T(16,128)(2,1)}', space=vmem, size = 0x12000, scoped, tag = 'scratch operand']
  #allocation3 [shape = 's32[2]{0}', space=sflag, size = 0x8, scoped, tag = 'scratch operand']
  #allocation4 [shape = 'bf16[112,288]{1,0:T(16,128)(2,1)}', space=vmem, size = 0x15000, scoped, tag = 'scratch operand']
  #allocation7 [shape = 's32[]', space=sflag, size = 0x4, offset = 0, fixed_abs, tag = 'sflag constant byte address 0x0 - dummy sync flag']
  #allocation8 [shape = 's32[]', space=sflag, size = 0x4, offset = 0, fixed_abs, tag = 'sflag constant byte address 0x0 - dummy sync flag']
  %s0 = inlined_call_operand.vmem [shape: bf16[2,256,128], index: 0, kind: input, shape index: {}]
  %s1 = inlined_call_operand.vmem [shape: bf16[128,32], index: 1, kind: input, shape index: {}]
  %s2 = inlined_call_operand.vmem [shape: f32[1,32], index: 2, kind: input, shape index: {}]
  %s3 = inlined_call_operand.vmem [shape: bf16[288,32], index: 3, kind: input, shape index: {}]
  %s4 = inlined_call_operand.vmem [shape: f32[1,32], index: 4, kind: input, shape index: {}]
  %s5 = inlined_call_operand.vmem [shape: bf16[32,128], index: 5, kind: input, shape index: {}]
  %s6 = inlined_call_operand.vmem [shape: f32[1,128], index: 6, kind: input, shape index: {}]
  %s7 = inlined_call_operand.hbm [shape: bf16[2,224,128], index: 7, kind: output, shape index: {}]
  %s8 = sld [smem:[#allocation0]]
  $region133: #{tpu_custom_call.1} parent=0
    _
  %s10 = ssub.s32 1, %s8
  %s11 = scalar_select 0, %s10, %s8
  $region1: #{tpu_custom_call.1} parent=0
    #allocation5 [shape = 'u8[57344]{0}', space=vmem, size = 0xe000, scoped, tag = 'output window, operand 0']
    #allocation6 [shape = 's32[2]{0}', space=sflag, size = 0x8, scoped, tag = 'scoped memory for tpu_custom_call.1']
    %12 = vsyncpa [#allocation6], 0
    %s13 = scalar_lea.sflag [#allocation6], 1
    %14 = vsyncpa %s13, 0
    loop: start=0, step=1, limit=6
    $region2: #{tpu_custom_call.1} parent=1 // loop_pre_header
      _
    $region3: #{tpu_custom_call.1} parent=1 // loop_header
      %s16 = sphi 0, %s20
      %p17 = scmp.ge.s32.totalorder %s16, 6
      %s23 = sphi 0, %s42
      %s24 = sphi 0, %s38
      %s25 = sphi 0, %s34
      %s26 = sphi 0, %s23
      %s27 = sphi 0, %s24
      %s28 = sphi 0, %s25
      %s29 = sphi 0, %s26
      %s30 = sphi 0, %s27
      %s31 = sphi 0, %s28
      %s43 = sphi 0, %s43
      %s45 = sphi 0, %s43
      %s46 = sphi 0, %s45
      %s60 = sphi 0, %s46
      %s64 = sphi 0, %s64
      %s66 = sphi 0, %s64
      %s67 = sphi 0, %s66
      %s81 = sphi 0, %s67
      %s85 = sphi 0, %s85
      %s87 = sphi 0, %s85
      %s88 = sphi 0, %s87
      %s102 = sphi 0, %s88
      %s106 = sphi 0, %s106
      %s108 = sphi 0, %s106
      %s109 = sphi 0, %s108
      %s123 = sphi 0, %s109
      %s127 = sphi 0, %s127
      %s129 = sphi 0, %s127
      %s130 = sphi 0, %s129
      %s144 = sphi 0, %s130
      %s148 = sphi 0, %s148
      %s150 = sphi 0, %s148
      %s151 = sphi 0, %s150
      %s165 = sphi 0, %s151
      %s177 = sphi 0, %s179
      %s180 = sphi 0, %s177
      %s181 = sphi 0, %s180
      %s197 = sphi 0, %s181
    $region4: #{tpu_custom_call.1} parent=1 // loop_header_branch
      %19 = sbr.rel (%p17) target = $region8
    $region5: #{tpu_custom_call.1} parent=1 // loop_body
      %s21 = ssub.s32 %s16, 1
      %s22 = ssub.s32 %s16, 2
      %s32 = sadd.s32 1, %s25
      %p33 = scmp.ge.s32.totalorder %s32, 2
      %s34 = scalar_select %p33, 0, %s32
      %s35 = sadd.s32 1, %s24
      %s36 = scalar_select %p33, %s35, %s24
      %p37 = scmp.ge.s32.totalorder %s36, 1
      %s38 = scalar_select %p37, 0, %s36
      %s39 = sadd.s32 1, %s23
      %s40 = scalar_select %p37, %s39, %s23
      %p41 = scmp.ge.s32.totalorder %s40, 2
      %s42 = scalar_select %p41, 0, %s40
      %s44 = sadd.s32 %s43, 1
      %p47 = scmp.eq.s32.totalorder %s16, 3
      %p48 = scmp.ne.s32.totalorder %s43, %s45
      %p49 = scmp.eq.s32.totalorder %s16, 0
      %p50 = por %p48, %p49
      %p51 = scmp.ne.s32.totalorder %s43, %s45
      %p52 = scmp.eq.s32.totalorder %s21, 3
      %p53 = por %p51, %p52
      %p54 = scmp.ne.s32.totalorder %s45, %s46
      %p55 = scmp.eq.s32.totalorder %s21, 0
      %p56 = por %p54, %p55
      %p57 = scmp.ne.s32.totalorder %s45, %s46
      %p58 = scmp.eq.s32.totalorder %s22, 3
      %p59 = por %p57, %p58
      %p61 = scmp.ne.s32.totalorder %s46, %s60
      %p62 = scmp.eq.s32.totalorder %s22, 0
      %p63 = por %p61, %p62
      %s65 = sadd.s32 %s64, 1
      %p68 = scmp.eq.s32.totalorder %s16, 3
      %p69 = scmp.ne.s32.totalorder %s64, %s66
      %p70 = scmp.eq.s32.totalorder %s16, 0
      %p71 = por %p69, %p70
      %p72 = scmp.ne.s32.totalorder %s64, %s66
      %p73 = scmp.eq.s32.totalorder %s21, 3
      %p74 = por %p72, %p73
      %p75 = scmp.ne.s32.totalorder %s66, %s67
      %p76 = scmp.eq.s32.totalorder %s21, 0
      %p77 = por %p75, %p76
      %p78 = scmp.ne.s32.totalorder %s66, %s67
      %p79 = scmp.eq.s32.totalorder %s22, 3
      %p80 = por %p78, %p79
      %p82 = scmp.ne.s32.totalorder %s67, %s81
      %p83 = scmp.eq.s32.totalorder %s22, 0
      %p84 = por %p82, %p83
      %s86 = sadd.s32 %s85, 1
      %p89 = scmp.eq.s32.totalorder %s16, 3
      %p90 = scmp.ne.s32.totalorder %s85, %s87
      %p91 = scmp.eq.s32.totalorder %s16, 0
      %p92 = por %p90, %p91
      %p93 = scmp.ne.s32.totalorder %s85, %s87
      %p94 = scmp.eq.s32.totalorder %s21, 3
      %p95 = por %p93, %p94
      %p96 = scmp.ne.s32.totalorder %s87, %s88
      %p97 = scmp.eq.s32.totalorder %s21, 0
      %p98 = por %p96, %p97
      %p99 = scmp.ne.s32.totalorder %s87, %s88
      %p100 = scmp.eq.s32.totalorder %s22, 3
      %p101 = por %p99, %p100
      %p103 = scmp.ne.s32.totalorder %s88, %s102
      %p104 = scmp.eq.s32.totalorder %s22, 0
      %p105 = por %p103, %p104
      %s107 = sadd.s32 %s106, 1
      %p110 = scmp.eq.s32.totalorder %s16, 3
      %p111 = scmp.ne.s32.totalorder %s106, %s108
      %p112 = scmp.eq.s32.totalorder %s16, 0
      %p113 = por %p111, %p112
      %p114 = scmp.ne.s32.totalorder %s106, %s108
      %p115 = scmp.eq.s32.totalorder %s21, 3
      %p116 = por %p114, %p115
      %p117 = scmp.ne.s32.totalorder %s108, %s109
      %p118 = scmp.eq.s32.totalorder %s21, 0
      %p119 = por %p117, %p118
      %p120 = scmp.ne.s32.totalorder %s108, %s109
      %p121 = scmp.eq.s32.totalorder %s22, 3
      %p122 = por %p120, %p121
      %p124 = scmp.ne.s32.totalorder %s109, %s123
      %p125 = scmp.eq.s32.totalorder %s22, 0
      %p126 = por %p124, %p125
      %s128 = sadd.s32 %s127, 1
      %p131 = scmp.eq.s32.totalorder %s16, 3
      %p132 = scmp.ne.s32.totalorder %s127, %s129
      %p133 = scmp.eq.s32.totalorder %s16, 0
      %p134 = por %p132, %p133
      %p135 = scmp.ne.s32.totalorder %s127, %s129
      %p136 = scmp.eq.s32.totalorder %s21, 3
      %p137 = por %p135, %p136
      %p138 = scmp.ne.s32.totalorder %s129, %s130
      %p139 = scmp.eq.s32.totalorder %s21, 0
      %p140 = por %p138, %p139
      %p141 = scmp.ne.s32.totalorder %s129, %s130
      %p142 = scmp.eq.s32.totalorder %s22, 3
      %p143 = por %p141, %p142
      %p145 = scmp.ne.s32.totalorder %s130, %s144
      %p146 = scmp.eq.s32.totalorder %s22, 0
      %p147 = por %p145, %p146
      %s149 = sadd.s32 %s148, 1
      %p152 = scmp.eq.s32.totalorder %s16, 3
      %p153 = scmp.ne.s32.totalorder %s148, %s150
      %p154 = scmp.eq.s32.totalorder %s16, 0
      %p155 = por %p153, %p154
      %p156 = scmp.ne.s32.totalorder %s148, %s150
      %p157 = scmp.eq.s32.totalorder %s21, 3
      %p158 = por %p156, %p157
      %p159 = scmp.ne.s32.totalorder %s150, %s151
      %p160 = scmp.eq.s32.totalorder %s21, 0
      %p161 = por %p159, %p160
      %p162 = scmp.ne.s32.totalorder %s150, %s151
      %p163 = scmp.eq.s32.totalorder %s22, 3
      %p164 = por %p162, %p163
      %p166 = scmp.ne.s32.totalorder %s151, %s165
      %p167 = scmp.eq.s32.totalorder %s22, 0
      %p168 = por %p166, %p167
      %s169 = smul.u32 %s24, 2
      %s170 = sadd.s32 %s169, %s25
      %s171 = smul.u32 %s38, 2
      %s172 = sadd.s32 %s171, %s34
      %s173 = ssub.s32 %s23, %s42
      %s174 = ssub.s32 %s170, %s172
      %s175 = sor.u32 %s173, %s174
      %p176 = scmp.eq.s32.totalorder %s175, 0
      %s178 = sadd.s32 %s177, 1
      %s179 = scalar_select %p176, %s177, %s178
      %p182 = pneg %p176
      %p183 = scmp.eq.s32.totalorder %s16, 3
      %p184 = por %p182, %p183
      %p185 = scmp.ne.s32.totalorder %s177, %s180
      %p186 = scmp.eq.s32.totalorder %s16, 0
      %p187 = por %p185, %p186
      %p188 = scmp.ne.s32.totalorder %s177, %s180
      %p189 = scmp.eq.s32.totalorder %s21, 3
      %p190 = por %p188, %p189
      %p191 = scmp.ne.s32.totalorder %s180, %s181
      %p192 = scmp.eq.s32.totalorder %s21, 0
      %p193 = por %p191, %p192
      %p194 = scmp.ne.s32.totalorder %s180, %s181
      %p195 = scmp.eq.s32.totalorder %s22, 3
      %p196 = por %p194, %p195
      %p198 = scmp.ne.s32.totalorder %s181, %s197
      %p199 = scmp.eq.s32.totalorder %s22, 0
      %p200 = por %p198, %p199
      %p201 = scmp.le.s32.totalorder 1, %s16
      %p202 = scmp.lt.s32.totalorder %s16, 5
      %p203 = pnand %p201, %p202
      %p204 = pneg %p203
      // Predicated region
      $region9: #{tpu_custom_call.1} parent=5 // pred_check
        _
      $region10: #{tpu_custom_call.1} parent=5 // pred_check_branch
        %206 = sbr.rel (%p203) target = $region12
      $region11: #{tpu_custom_call.1} parent=5 // pred_region
        %s207 = ssub.s32 %s16, 1
        // Predicated region
        $region13: #{tpu_custom_call.1} parent=11 // pred_check
          %p208 = pneg %p56
        $region14: #{tpu_custom_call.1} parent=11 // pred_check_branch
          %210 = sbr.rel (%p208) target = $region16
        $region15: #{tpu_custom_call.1} parent=11 // pred_region
          _
        $region16: #{tpu_custom_call.1} parent=11 // pred_fallthru
          _
        // Predicated region
        $region17: #{tpu_custom_call.1} parent=11 // pred_check
          %p211 = pneg %p77
        $region18: #{tpu_custom_call.1} parent=11 // pred_check_branch
          %213 = sbr.rel (%p211) target = $region20
        $region19: #{tpu_custom_call.1} parent=11 // pred_region
          _
        $region20: #{tpu_custom_call.1} parent=11 // pred_fallthru
          _
        // Predicated region
        $region21: #{tpu_custom_call.1} parent=11 // pred_check
          %p214 = pneg %p98
        $region22: #{tpu_custom_call.1} parent=11 // pred_check_branch
          %216 = sbr.rel (%p214) target = $region24
        $region23: #{tpu_custom_call.1} parent=11 // pred_region
          _
        $region24: #{tpu_custom_call.1} parent=11 // pred_fallthru
          _
        // Predicated region
        $region25: #{tpu_custom_call.1} parent=11 // pred_check
          %p217 = pneg %p119
        $region26: #{tpu_custom_call.1} parent=11 // pred_check_branch
          %219 = sbr.rel (%p217) target = $region28
        $region27: #{tpu_custom_call.1} parent=11 // pred_region
          _
        $region28: #{tpu_custom_call.1} parent=11 // pred_fallthru
          _
        // Predicated region
        $region29: #{tpu_custom_call.1} parent=11 // pred_check
          %p220 = pneg %p140
        $region30: #{tpu_custom_call.1} parent=11 // pred_check_branch
          %222 = sbr.rel (%p220) target = $region32
        $region31: #{tpu_custom_call.1} parent=11 // pred_region
          _
        $region32: #{tpu_custom_call.1} parent=11 // pred_fallthru
          _
        // Predicated region
        $region33: #{tpu_custom_call.1} parent=11 // pred_check
          %p223 = pneg %p161
        $region34: #{tpu_custom_call.1} parent=11 // pred_check_branch
          %225 = sbr.rel (%p223) target = $region36
        $region35: #{tpu_custom_call.1} parent=11 // pred_region
          _
        $region36: #{tpu_custom_call.1} parent=11 // pred_fallthru
          _
      $region12: #{tpu_custom_call.1} parent=5 // pred_fallthru
        _
      %p226 = scmp.lt.s32.totalorder %s16, 4
      // Predicated region
      $region37: #{tpu_custom_call.1} parent=5 // pred_check
        %p227 = pneg %p226
      $region38: #{tpu_custom_call.1} parent=5 // pred_check_branch
        %229 = sbr.rel (%p227) target = $region40
      $region39: #{tpu_custom_call.1} parent=5 // pred_region
        _
      $region40: #{tpu_custom_call.1} parent=5 // pred_fallthru
        _
      %p230 = scmp.le.s32.totalorder 1, %s16
      %p231 = scmp.lt.s32.totalorder %s16, 5
      %p232 = pnand %p230, %p231
      %p233 = pneg %p232
      // Predicated region
      $region41: #{tpu_custom_call.1} parent=5 // pred_check
        _
      $region42: #{tpu_custom_call.1} parent=5 // pred_check_branch
        %235 = sbr.rel (%p232) target = $region44
      $region43: #{tpu_custom_call.1} parent=5 // pred_region
        %s236 = ssub.s32 %s16, 1
        %p237 = pneg %p56
        %p238 = pneg %p53
        %p239 = pneg %p77
        %p240 = pneg %p74
        %p241 = pneg %p98
        %p242 = pneg %p95
        %p243 = pneg %p119
        %p244 = pneg %p116
        %p245 = pneg %p140
        %p246 = pneg %p137
        %p247 = pneg %p161
        %p248 = pneg %p158
        %p249 = pneg %p193
        %p250 = pneg %p190
        %s251 = sand.u32 %s180, 1
        %s252 = scalar_lea.sflag [#allocation6], %s251
        %s253 = sand.u32 %s180, 1
        %s254 = smul.addr %s253, 56
        %s255 = scalar_lea.vmem [#allocation5], %s254
        %s256 = smul.u32 %s27, 2
        %s257 = sadd.s32 %s256, %s28
        %s258 = smul.u32 14, %s257
        %s260 = smul.u32 %s27, 2
        %s261 = sadd.s32 %s260, %s28
        %p262 = scmp.eq.s32.totalorder %s28, 0
        // Predicated region
        $region45: #{tpu_custom_call.1} parent=43 // pred_check
          %p263 = pneg %p262
        $region46: #{tpu_custom_call.1} parent=43 // pred_check_branch
          %265 = sbr.rel (%p263) target = $region48
        $region47: #{tpu_custom_call.1} parent=43 // pred_region
          %s266 = smul.u32 %s261, 112
          %s267 = sshra.s32 %s266, 3
          %s268 = sand.u32 %s266, 7
          %s269 = smul.u32 %s26, 32
          %s270 = sadd.s32 %s267, %s269
          %s271 = smul.addr %s270, 4
          %s272 = scalar_lea.vmem %s0, %s271
          %p274 = scmp.lt.u32.totalorder 72, 8
          %p275 = pneg %p274
          // Predicated region
          $region49: #{tpu_custom_call.1} parent=47 // pred_check
            _
          $region50: #{tpu_custom_call.1} parent=47 // pred_check_branch
            %277 = sbr.rel (%p274) target = $region52
          $region51: #{tpu_custom_call.1} parent=47 // pred_region
            %s292 = sand.u32 72, 7
            %p293 = scmp.eq.s32.totalorder %s292, 0
            // Predicated region
            $region64: #{tpu_custom_call.1} parent=51 // pred_check
              %p294 = pneg %p293
            $region65: #{tpu_custom_call.1} parent=51 // pred_check_branch
              %296 = sbr.rel (%p294) target = $region67
            $region66: #{tpu_custom_call.1} parent=51 // pred_region
              loop: start=0, step=1, limit=1
              $region68: #{tpu_custom_call.1} parent=66 // loop_pre_header
                _
              $region69: #{tpu_custom_call.1} parent=66 // loop_header
                %s298 = sphi 0, %s302
                %p299 = scmp.ge.s32.totalorder %s298, 1
                %s303 = sphi %s272, %s272
                %s304 = sphi [#allocation2], [#allocation2]
              $region70: #{tpu_custom_call.1} parent=66 // loop_header_branch
                %301 = sbr.rel (%p299) target = $region74
              $region71: #{tpu_custom_call.1} parent=66 // loop_body
                %v305 = vld [vmem:[%s303] sm:$0xff]
                %306 = vst [vmem:[%s304] sm:$0xff] %v305
                %v307 = vld [vmem:[%s303 + $0x8] sm:$0xff]
                %308 = vst [vmem:[%s304 + $0x8] sm:$0xff] %v307
                %v309 = vld [vmem:[%s303 + $0x10] sm:$0xff]
                %310 = vst [vmem:[%s304 + $0x10] sm:$0xff] %v309
                %v311 = vld [vmem:[%s303 + $0x18] sm:$0xff]
                %312 = vst [vmem:[%s304 + $0x18] sm:$0xff] %v311
                %v313 = vld [vmem:[%s303 + $0x20] sm:$0xff]
                %314 = vst [vmem:[%s304 + $0x20] sm:$0xff] %v313
                %v315 = vld [vmem:[%s303 + $0x28] sm:$0xff]
                %316 = vst [vmem:[%s304 + $0x28] sm:$0xff] %v315
                %v317 = vld [vmem:[%s303 + $0x30] sm:$0xff]
                %318 = vst [vmem:[%s304 + $0x30] sm:$0xff] %v317
                %v319 = vld [vmem:[%s303 + $0x38] sm:$0xff]
                %320 = vst [vmem:[%s304 + $0x38] sm:$0xff] %v319
                %v321 = vld [vmem:[%s303 + $0x40] sm:$0xff]
                %322 = vst [vmem:[%s304 + $0x40] sm:$0xff] %v321
              $region72: #{tpu_custom_call.1} parent=66 // loop_footer
                %s302 = sadd.s32 1, %s298
              $region73: #{tpu_custom_call.1} parent=66 // loop_footer_branch
                %297 = sbr.rel target = $region69
              $region74: #{tpu_custom_call.1} parent=66 // loop_exit
                _
            $region67: #{tpu_custom_call.1} parent=51 // pred_fallthru
              _
            %p323 = pneg %p293
            // Predicated region
            $region75: #{tpu_custom_call.1} parent=51 // pred_check
              _
            $region76: #{tpu_custom_call.1} parent=51 // pred_check_branch
              %325 = sbr.rel (%p293) target = $region78
            $region77: #{tpu_custom_call.1} parent=51 // pred_region
              %s326 = sand.u32 72, 7
            $region78: #{tpu_custom_call.1} parent=51 // pred_fallthru
              _
          $region52: #{tpu_custom_call.1} parent=47 // pred_fallthru
            _
          // Predicated region
          $region53: #{tpu_custom_call.1} parent=47 // pred_check
            %p278 = pneg %p274
          $region54: #{tpu_custom_call.1} parent=47 // pred_check_branch
            %280 = sbr.rel (%p278) target = $region56
          $region55: #{tpu_custom_call.1} parent=47 // pred_region
            %s281 = sshllo.u32 0, 72
            loop: start=0, step=1, limit=1
            $region57: #{tpu_custom_call.1} parent=55 // loop_pre_header
              _
            $region58: #{tpu_custom_call.1} parent=55 // loop_header
              %s283 = sphi 0, %s287
              %p284 = scmp.ge.s32.totalorder %s283, 1
              %s288 = sphi %s272, %s272
              %s289 = sphi [#allocation2], [#allocation2]
            $region59: #{tpu_custom_call.1} parent=55 // loop_header_branch
              %286 = sbr.rel (%p284) target = $region63
            $region60: #{tpu_custom_call.1} parent=55 // loop_body
              %v290 = vld [vmem:[%s288] sm:%s281]
              %291 = vst [vmem:[%s289] sm:%s281] %v290
            $region61: #{tpu_custom_call.1} parent=55 // loop_footer
              %s287 = sadd.s32 1, %s283
            $region62: #{tpu_custom_call.1} parent=55 // loop_footer_branch
              %282 = sbr.rel target = $region58
            $region63: #{tpu_custom_call.1} parent=55 // loop_exit
              _
          $region56: #{tpu_custom_call.1} parent=47 // pred_fallthru
            _
          // Predicated region
          $region79: #{tpu_custom_call.1} parent=47 // pred_check
            _
          $region80: #{tpu_custom_call.1} parent=47 // pred_check_branch
            %329 = sbr.rel (0) target = $region82
          $region81: #{tpu_custom_call.1} parent=47 // pred_region
            %330 = vsyncadd [#allocation3], 1152
          $region82: #{tpu_custom_call.1} parent=47 // pred_fallthru
            _
        $region48: #{tpu_custom_call.1} parent=43 // pred_fallthru
          _
        %p331 = scmp.lt.s32.totalorder %s28, 0
        %s332 = ssub.s32 0, %s28
        %s333 = scalar_select %p331, %s332, %s28
        %s334 = sand.u32 %s333, 1
        %s335 = ssub.s32 0, %s334
        %s336 = scalar_select %p331, %s335, %s334
        %p337 = scmp.ne.s32.totalorder %s336, 0
        %p338 = scmp.lt.s32.totalorder %s336, 0
        %p339 = pnand %p338, %p337
        %p340 = pneg %p339
        %s341 = sadd.s32 %s336, 2
        %s342 = scalar_select %p340, %s341, %s336
        %s343 = smul.u32 %s261, 112
        %s344 = smul.u32 %s342, 9
        %s345 = smul.addr %s344, 8
        %s346 = scalar_lea.vmem [#allocation2], %s345
        %s347 = scalar_lea.sflag [#allocation3], %s342
        %s348 = smul.u32 4, 18
        %s349 = smul.u32 %s348, 1
        %s350 = sshll.u32 %s349, 4
        %351 = dma.done %s347, %s350
        %s352 = sadd.s32 %s28, 1
        %p353 = scmp.lt.s32.totalorder %s352, 2
        // Predicated region
        $region83: #{tpu_custom_call.1} parent=43 // pred_check
          %p354 = pneg %p353
        $region84: #{tpu_custom_call.1} parent=43 // pred_check_branch
          %356 = sbr.rel (%p354) target = $region86
        $region85: #{tpu_custom_call.1} parent=43 // pred_region
          %s357 = sadd.s32 %s261, 1
          %s358 = ssub.s32 1, %s342
          %s359 = smul.u32 %s357, 112
          %s360 = sshra.s32 %s359, 3
          %s361 = sand.u32 %s359, 7
          %s362 = smul.u32 %s26, 32
          %s363 = sadd.s32 %s360, %s362
          %s364 = smul.addr %s363, 4
          %s365 = scalar_lea.vmem %s0, %s364
          %s366 = smul.u32 %s358, 9
          %s367 = smul.addr %s366, 8
          %s368 = scalar_lea.vmem [#allocation2], %s367
          %s369 = scalar_lea.sflag [#allocation3], %s358
          %p371 = scmp.lt.u32.totalorder 72, 8
          %p372 = pneg %p371
          // Predicated region
          $region87: #{tpu_custom_call.1} parent=85 // pred_check
            _
          $region88: #{tpu_custom_call.1} parent=85 // pred_check_branch
            %374 = sbr.rel (%p371) target = $region90
          $region89: #{tpu_custom_call.1} parent=85 // pred_region
            %s389 = sand.u32 72, 7
            %p390 = scmp.eq.s32.totalorder %s389, 0
            // Predicated region
            $region102: #{tpu_custom_call.1} parent=89 // pred_check
              %p391 = pneg %p390
            $region103: #{tpu_custom_call.1} parent=89 // pred_check_branch
              %393 = sbr.rel (%p391) target = $region105
            $region104: #{tpu_custom_call.1} parent=89 // pred_region
              loop: start=0, step=1, limit=1
              $region106: #{tpu_custom_call.1} parent=104 // loop_pre_header
                _
              $region107: #{tpu_custom_call.1} parent=104 // loop_header
                %s395 = sphi 0, %s399
                %p396 = scmp.ge.s32.totalorder %s395, 1
                %s400 = sphi %s365, %s365
                %s401 = sphi %s368, %s368
              $region108: #{tpu_custom_call.1} parent=104 // loop_header_branch
                %398 = sbr.rel (%p396) target = $region112
              $region109: #{tpu_custom_call.1} parent=104 // loop_body
                %v402 = vld [vmem:[%s400] sm:$0xff]
                %403 = vst [vmem:[%s401] sm:$0xff] %v402
                %v404 = vld [vmem:[%s400 + $0x8] sm:$0xff]
                %405 = vst [vmem:[%s401 + $0x8] sm:$0xff] %v404
                %v406 = vld [vmem:[%s400 + $0x10] sm:$0xff]
                %407 = vst [vmem:[%s401 + $0x10] sm:$0xff] %v406
                %v408 = vld [vmem:[%s400 + $0x18] sm:$0xff]
                %409 = vst [vmem:[%s401 + $0x18] sm:$0xff] %v408
                %v410 = vld [vmem:[%s400 + $0x20] sm:$0xff]
                %411 = vst [vmem:[%s401 + $0x20] sm:$0xff] %v410
                %v412 = vld [vmem:[%s400 + $0x28] sm:$0xff]
                %413 = vst [vmem:[%s401 + $0x28] sm:$0xff] %v412
                %v414 = vld [vmem:[%s400 + $0x30] sm:$0xff]
                %415 = vst [vmem:[%s401 + $0x30] sm:$0xff] %v414
                %v416 = vld [vmem:[%s400 + $0x38] sm:$0xff]
                %417 = vst [vmem:[%s401 + $0x38] sm:$0xff] %v416
                %v418 = vld [vmem:[%s400 + $0x40] sm:$0xff]
                %419 = vst [vmem:[%s401 + $0x40] sm:$0xff] %v418
              $region110: #{tpu_custom_call.1} parent=104 // loop_footer
                %s399 = sadd.s32 1, %s395
              $region111: #{tpu_custom_call.1} parent=104 // loop_footer_branch
                %394 = sbr.rel target = $region107
              $region112: #{tpu_custom_call.1} parent=104 // loop_exit
                _
            $region105: #{tpu_custom_call.1} parent=89 // pred_fallthru
              _
            %p420 = pneg %p390
            // Predicated region
            $region113: #{tpu_custom_call.1} parent=89 // pred_check
              _
            $region114: #{tpu_custom_call.1} parent=89 // pred_check_branch
              %422 = sbr.rel (%p390) target = $region116
            $region115: #{tpu_custom_call.1} parent=89 // pred_region
              %s423 = sand.u32 72, 7
            $region116: #{tpu_custom_call.1} parent=89 // pred_fallthru
              _
          $region90: #{tpu_custom_call.1} parent=85 // pred_fallthru
            _
          // Predicated region
          $region91: #{tpu_custom_call.1} parent=85 // pred_check
            %p375 = pneg %p371
          $region92: #{tpu_custom_call.1} parent=85 // pred_check_branch
            %377 = sbr.rel (%p375) target = $region94
          $region93: #{tpu_custom_call.1} parent=85 // pred_region
            %s378 = sshllo.u32 0, 72
            loop: start=0, step=1, limit=1
            $region95: #{tpu_custom_call.1} parent=93 // loop_pre_header
              _
            $region96: #{tpu_custom_call.1} parent=93 // loop_header
              %s380 = sphi 0, %s384
              %p381 = scmp.ge.s32.totalorder %s380, 1
              %s385 = sphi %s365, %s365
              %s386 = sphi %s368, %s368
            $region97: #{tpu_custom_call.1} parent=93 // loop_header_branch
              %383 = sbr.rel (%p381) target = $region101
            $region98: #{tpu_custom_call.1} parent=93 // loop_body
              %v387 = vld [vmem:[%s385] sm:%s378]
              %388 = vst [vmem:[%s386] sm:%s378] %v387
            $region99: #{tpu_custom_call.1} parent=93 // loop_footer
              %s384 = sadd.s32 1, %s380
            $region100: #{tpu_custom_call.1} parent=93 // loop_footer_branch
              %379 = sbr.rel target = $region96
            $region101: #{tpu_custom_call.1} parent=93 // loop_exit
              _
          $region94: #{tpu_custom_call.1} parent=85 // pred_fallthru
            _
          // Predicated region
          $region117: #{tpu_custom_call.1} parent=85 // pred_check
            _
          $region118: #{tpu_custom_call.1} parent=85 // pred_check_branch
            %426 = sbr.rel (0) target = $region120
          $region119: #{tpu_custom_call.1} parent=85 // pred_region
            %427 = vsyncadd %s369, 1152
          $region120: #{tpu_custom_call.1} parent=85 // pred_fallthru
            _
        $region86: #{tpu_custom_call.1} parent=43 // pred_fallthru
          _
        %v428 = vld [vmem:[%s346] sm:$0xff]
        %v429 = vld [vmem:[%s346 + $0x8] sm:$0xff]
        %v430 = vld [vmem:[%s346 + $0x10] sm:$0xff]
        %v431 = vld [vmem:[%s346 + $0x18] sm:$0xff]
        %v432 = vld [vmem:[%s346 + $0x20] sm:$0xff]
        %v433 = vld [vmem:[%s346 + $0x28] sm:$0xff]
        %v434 = vld [vmem:[%s346 + $0x30] sm:$0xff]
        %v435 = vld [vmem:[%s346 + $0x38] sm:$0xff]
        %v436 = vld [vmem:[%s346 + $0x40] sm:$0xff]
        %v437 = vld [vmem:[%s1] sm:$0xf]
        %v438 = vld [vmem:[%s1 + $0x4] sm:$0xf]
        %v439 = vld [vmem:[%s1 + $0x8] sm:$0xf]
        %v440 = vld [vmem:[%s1 + $0xc] sm:$0xf]
        %v441 = vld [vmem:[%s1 + $0x10] sm:$0xf]
        %v442 = vld [vmem:[%s1 + $0x14] sm:$0xf]
        %v443 = vld [vmem:[%s1 + $0x18] sm:$0xf]
        %v444 = vld [vmem:[%s1 + $0x1c] sm:$0xf]
        %v445 = vld [vmem:[%s1 + $0x20] sm:$0xf]
        %v446 = vld [vmem:[%s1 + $0x24] sm:$0xf]
        %v447 = vld [vmem:[%s1 + $0x28] sm:$0xf]
        %v448 = vld [vmem:[%s1 + $0x2c] sm:$0xf]
        %v449 = vld [vmem:[%s1 + $0x30] sm:$0xf]
        %v450 = vld [vmem:[%s1 + $0x34] sm:$0xf]
        %v451 = vld [vmem:[%s1 + $0x38] sm:$0xf]
        %v452 = vld [vmem:[%s1 + $0x3c] sm:$0xf]
        %v453 = vld [vmem:[%s2] sm:$0x1]
        %v455 = vlaneseq
        %v456 = vshrl.u32 %v455, 7
        %v457 = vsub.s32 0, %v456
        %v458 = vrot.slane %v453, %v457
        %v476 = vunpack.c.l.b16 %v437
        %v477 = vunpack.c.l.b16 %v438
        %v478 = vunpack.c.l.b16 %v439
        %v479 = vunpack.c.l.b16 %v440
        %v480 = vunpack.c.l.b16 %v441
        %v481 = vunpack.c.l.b16 %v442
        %v482 = vunpack.c.l.b16 %v443
        %v483 = vunpack.c.l.b16 %v444
        %v484 = vunpack.c.l.b16 %v445
        %v485 = vunpack.c.l.b16 %v446
        %v486 = vunpack.c.l.b16 %v447
        %v487 = vunpack.c.l.b16 %v448
        %v488 = vunpack.c.l.b16 %v449
        %v489 = vunpack.c.l.b16 %v450
        %v490 = vunpack.c.l.b16 %v451
        %v491 = vunpack.c.l.b16 %v452
        %v492 = vpack.c.b16 %v477, %v476
        %v493 = vpack.c.b16 %v479, %v478
        %v494 = vpack.c.b16 %v481, %v480
        %v495 = vpack.c.b16 %v483, %v482
        %v496 = vpack.c.b16 %v485, %v484
        %v497 = vpack.c.b16 %v487, %v486
        %v498 = vpack.c.b16 %v489, %v488
        %v499 = vpack.c.b16 %v491, %v490
        %508 = vmatprep.subr.bf16.mxu0 0
        %509 = vmatpush1.bf16.msra.mxu0 %v492
        %510 = vmatprep.subr.bf16.mxu0 0
        %511 = vmatpush1.bf16.msra.mxu0 %v493
        %512 = vmatprep.subr.bf16.mxu0 0
        %513 = vmatpush1.bf16.msra.mxu0 %v494
        %514 = vmatprep.subr.bf16.mxu0 0
        %515 = vmatpush1.bf16.msra.mxu0 %v495
        %516 = vmatprep.subr.bf16.mxu0 0
        %517 = vmatpush1.bf16.msra.mxu0 %v496
        %518 = vmatprep.subr.bf16.mxu0 0
        %519 = vmatpush1.bf16.msra.mxu0 %v497
        %520 = vmatprep.subr.bf16.mxu0 0
        %521 = vmatpush1.bf16.msra.mxu0 %v498
        %522 = vmatprep.subr.bf16.mxu0 0
        %523 = vmatpush1.bf16.msra.mxu0 %v499
        %524 = vmatprep.subr.bf16.mxu0 0
        %525 = vmatpush1.bf16.msra.mxu0 0
        %526 = vmatprep.subr.bf16.mxu0 0
        %527 = vmatpush1.bf16.msra.mxu0 0
        %528 = vmatprep.subr.bf16.mxu0 0
        %529 = vmatpush1.bf16.msra.mxu0 0
        %530 = vmatprep.subr.bf16.mxu0 0
        %531 = vmatpush1.bf16.msra.mxu0 0
        %532 = vmatprep.subr.bf16.mxu0 0
        %533 = vmatpush1.bf16.msra.mxu0 0
        %534 = vmatprep.subr.bf16.mxu0 0
        %535 = vmatpush1.bf16.msra.mxu0 0
        %536 = vmatprep.subr.bf16.mxu0 0
        %537 = vmatpush1.bf16.msra.mxu0 0
        %538 = vmatprep.subr.bf16.mxu0 0
        %539 = vmatpush1.bf16.msra.mxu0 0
        %540 = vmatprep.mubr.bf16.mxu0 0
        %541 = vmatmul.mubr.bf16.gmra.mrb[0].mxu0 %v428
        %v542 = vpop.f32.mrb[0].mxu0
        %v543 = vadd.f32 %v458, %v542
        %v544 = vpop.f32.mrb[0].mxu0
        %v545 = vpop.f32.mrb[0].mxu0
        %v546 = vadd.f32 %v458, %v545
        %v547 = vpop.f32.mrb[0].mxu0
        %548 = vmatprep.mubr.bf16.mxu0 0
        %549 = vmatmul.mubr.bf16.gmra.mrb[0].mxu0 %v429
        %v550 = vpop.f32.mrb[0].mxu0
        %v551 = vadd.f32 %v458, %v550
        %v552 = vpop.f32.mrb[0].mxu0
        %v553 = vpop.f32.mrb[0].mxu0
        %v554 = vadd.f32 %v458, %v553
        %v555 = vpop.f32.mrb[0].mxu0
        %556 = vmatprep.mubr.bf16.mxu0 0
        %557 = vmatmul.mubr.bf16.gmra.mrb[0].mxu0 %v430
        %v558 = vpop.f32.mrb[0].mxu0
        %v559 = vadd.f32 %v458, %v558
        %v560 = vpop.f32.mrb[0].mxu0
        %v561 = vpop.f32.mrb[0].mxu0
        %v562 = vadd.f32 %v458, %v561
        %v563 = vpop.f32.mrb[0].mxu0
        %564 = vmatprep.mubr.bf16.mxu0 0
        %565 = vmatmul.mubr.bf16.gmra.mrb[0].mxu0 %v431
        %v566 = vpop.f32.mrb[0].mxu0
        %v567 = vadd.f32 %v458, %v566
        %v568 = vpop.f32.mrb[0].mxu0
        %v569 = vpop.f32.mrb[0].mxu0
        %v570 = vadd.f32 %v458, %v569
        %v571 = vpop.f32.mrb[0].mxu0
        %572 = vmatprep.mubr.bf16.mxu0 0
        %573 = vmatmul.mubr.bf16.gmra.mrb[0].mxu0 %v432
        %v574 = vpop.f32.mrb[0].mxu0
        %v575 = vadd.f32 %v458, %v574
        %v576 = vpop.f32.mrb[0].mxu0
        %v577 = vpop.f32.mrb[0].mxu0
        %v578 = vadd.f32 %v458, %v577
        %v579 = vpop.f32.mrb[0].mxu0
        %580 = vmatprep.mubr.bf16.mxu0 0
        %581 = vmatmul.mubr.bf16.gmra.mrb[0].mxu0 %v433
        %v582 = vpop.f32.mrb[0].mxu0
        %v583 = vadd.f32 %v458, %v582
        %v584 = vpop.f32.mrb[0].mxu0
        %v585 = vpop.f32.mrb[0].mxu0
        %v586 = vadd.f32 %v458, %v585
        %v587 = vpop.f32.mrb[0].mxu0
        %588 = vmatprep.mubr.bf16.mxu0 0
        %589 = vmatmul.mubr.bf16.gmra.mrb[0].mxu0 %v434
        %v590 = vpop.f32.mrb[0].mxu0
        %v591 = vadd.f32 %v458, %v590
        %v592 = vpop.f32.mrb[0].mxu0
        %v593 = vpop.f32.mrb[0].mxu0
        %v594 = vadd.f32 %v458, %v593
        %v595 = vpop.f32.mrb[0].mxu0
        %596 = vmatprep.mubr.bf16.mxu0 0
        %597 = vmatmul.mubr.bf16.gmra.mrb[0].mxu0 %v435
        %v598 = vpop.f32.mrb[0].mxu0
        %v599 = vadd.f32 %v458, %v598
        %v600 = vpop.f32.mrb[0].mxu0
        %v601 = vpop.f32.mrb[0].mxu0
        %v602 = vadd.f32 %v458, %v601
        %v603 = vpop.f32.mrb[0].mxu0
        %604 = vmatprep.mubr.bf16.mxu0 0
        %605 = vmatmul.mubr.bf16.gmra.mrb[0].mxu0 %v436
        %v606 = vpop.f32.mrb[0].mxu0
        %v607 = vadd.f32 %v458, %v606
        %v608 = vpop.f32.mrb[0].mxu0
        %v609 = vpop.f32.mrb[0].mxu0
        %v610 = vadd.f32 %v458, %v609
        %v611 = vpop.f32.mrb[0].mxu0
        %612 = vdwg.mxu0
        %v613 = vmax.f32 %v543, 0.0
        %v614 = vmax.f32 %v546, 0.0
        %v615 = vmax.f32 %v551, 0.0
        %v616 = vmax.f32 %v554, 0.0
        %v617 = vmax.f32 %v559, 0.0
        %v618 = vmax.f32 %v562, 0.0
        %v619 = vmax.f32 %v567, 0.0
        %v620 = vmax.f32 %v570, 0.0
        %v621 = vmax.f32 %v575, 0.0
        %v622 = vmax.f32 %v578, 0.0
        %v623 = vmax.f32 %v583, 0.0
        %v624 = vmax.f32 %v586, 0.0
        %v625 = vmax.f32 %v591, 0.0
        %v626 = vmax.f32 %v594, 0.0
        %v627 = vmax.f32 %v599, 0.0
        %v628 = vmax.f32 %v602, 0.0
        %v629 = vmax.f32 %v607, 0.0
        %v630 = vmax.f32 %v610, 0.0
        %v631 = vpack.c.bf16 %v614, %v613
        %v632 = vpack.c.bf16 %v616, %v615
        %v633 = vpack.c.bf16 %v618, %v617
        %v634 = vpack.c.bf16 %v620, %v619
        %v635 = vpack.c.bf16 %v622, %v621
        %v636 = vpack.c.bf16 %v624, %v623
        %v637 = vpack.c.bf16 %v626, %v625
        %vm638 = vcmask 261120
        %639 = vst.msk [vmem:[#allocation4] sm:$0xff] %vm638, %v631
        %640 = vst.msk [vmem:[#allocation4 + $0x18] sm:$0xff] %vm638, %v632
        %641 = vst.msk [vmem:[#allocation4 + $0x30] sm:$0xff] %vm638, %v633
        %642 = vst.msk [vmem:[#allocation4 + $0x48] sm:$0xff] %vm638, %v634
        %643 = vst.msk [vmem:[#allocation4 + $0x60] sm:$0xff] %vm638, %v635
        %644 = vst.msk [vmem:[#allocation4 + $0x78] sm:$0xff] %vm638, %v636
        %645 = vst.msk [vmem:[#allocation4 + $0x90] sm:$0xff] %vm638, %v637
        %v646 = vrot.slane %v613, 1
        %v647 = vrot.slane %v614, 1
        %v648 = vrot.slane %v615, 1
        %v649 = vrot.slane %v616, 1
        %v650 = vrot.slane %v617, 1
        %v651 = vrot.slane %v618, 1
        %v652 = vrot.slane %v619, 1
        %v653 = vrot.slane %v620, 1
        %v654 = vrot.slane %v621, 1
        %v655 = vrot.slane %v622, 1
        %v656 = vrot.slane %v623, 1
        %v657 = vrot.slane %v624, 1
        %v658 = vrot.slane %v625, 1
        %v659 = vrot.slane %v626, 1
        %v660 = vrot.slane %v627, 1
        %v661 = vlaneseq
        %v662 = vshrl.u32 %v661, 7
        %vm663 = vcmp.lt.s32.totalorder %v662, 7
        %v664 = vsel %vm663, %v659, %v660
        %v665 = vsel %vm663, %v658, %v659
        %v666 = vsel %vm663, %v657, %v658
        %v667 = vsel %vm663, %v656, %v657
        %v668 = vsel %vm663, %v655, %v656
        %v669 = vsel %vm663, %v654, %v655
        %v670 = vsel %vm663, %v653, %v654
        %v671 = vsel %vm663, %v652, %v653
        %v672 = vsel %vm663, %v651, %v652
        %v673 = vsel %vm663, %v650, %v651
        %v674 = vsel %vm663, %v649, %v650
        %v675 = vsel %vm663, %v648, %v649
        %v676 = vsel %vm663, %v647, %v648
        %v677 = vsel %vm663, %v646, %v647
        %v678 = vpack.c.bf16 %v676, %v677
        %v679 = vpack.c.bf16 %v674, %v675
        %v680 = vpack.c.bf16 %v672, %v673
        %v681 = vpack.c.bf16 %v670, %v671
        %v682 = vpack.c.bf16 %v668, %v669
        %v683 = vpack.c.bf16 %v666, %v667
        %v684 = vpack.c.bf16 %v664, %v665
        %692 = vrot.lane.b32.xlu0 %v678, 32
        %v693 = vpop.permute.xlu0 %692
        %694 = vrot.lane.b32.xlu0 %v679, 32
        %v695 = vpop.permute.xlu0 %694
        %696 = vrot.lane.b32.xlu0 %v680, 32
        %v697 = vpop.permute.xlu0 %696
        %698 = vrot.lane.b32.xlu0 %v681, 32
        %v699 = vpop.permute.xlu0 %698
        %700 = vrot.lane.b32.xlu0 %v682, 32
        %v701 = vpop.permute.xlu0 %700
        %702 = vrot.lane.b32.xlu0 %v683, 32
        %v703 = vpop.permute.xlu0 %702
        %704 = vrot.lane.b32.xlu0 %v684, 32
        %v705 = vpop.permute.xlu0 %704
        %vm713 = vcmask 523520
        %714 = vst.msk [vmem:[#allocation4] sm:$0xff] %vm713, %v693
        %715 = vst.msk [vmem:[#allocation4 + $0x18] sm:$0xff] %vm713, %v695
        %716 = vst.msk [vmem:[#allocation4 + $0x30] sm:$0xff] %vm713, %v697
        %717 = vst.msk [vmem:[#allocation4 + $0x48] sm:$0xff] %vm713, %v699
        %718 = vst.msk [vmem:[#allocation4 + $0x60] sm:$0xff] %vm713, %v701
        %719 = vst.msk [vmem:[#allocation4 + $0x78] sm:$0xff] %vm713, %v703
        %720 = vst.msk [vmem:[#allocation4 + $0x90] sm:$0xff] %vm713, %v705
        %v721 = vrot.slane %v613, 2
        %v722 = vrot.slane %v614, 2
        %v723 = vrot.slane %v615, 2
        %v724 = vrot.slane %v616, 2
        %v725 = vrot.slane %v617, 2
        %v726 = vrot.slane %v618, 2
        %v727 = vrot.slane %v619, 2
        %v728 = vrot.slane %v620, 2
        %v729 = vrot.slane %v621, 2
        %v730 = vrot.slane %v622, 2
        %v731 = vrot.slane %v623, 2
        %v732 = vrot.slane %v624, 2
        %v733 = vrot.slane %v625, 2
        %v734 = vrot.slane %v626, 2
        %v735 = vrot.slane %v627, 2
        %vm736 = vcmp.lt.s32.totalorder %v662, 6
        %v737 = vsel %vm736, %v734, %v735
        %v738 = vsel %vm736, %v733, %v734
        %v739 = vsel %vm736, %v732, %v733
        %v740 = vsel %vm736, %v731, %v732
        %v741 = vsel %vm736, %v730, %v731
        %v742 = vsel %vm736, %v729, %v730
        %v743 = vsel %vm736, %v728, %v729
        %v744 = vsel %vm736, %v727, %v728
        %v745 = vsel %vm736, %v726, %v727
        %v746 = vsel %vm736, %v725, %v726
        %v747 = vsel %vm736, %v724, %v725
        %v748 = vsel %vm736, %v723, %v724
        %v749 = vsel %vm736, %v722, %v723
        %v750 = vsel %vm736, %v721, %v722
        %v751 = vpack.c.bf16 %v749, %v750
        %v752 = vpack.c.bf16 %v747, %v748
        %v753 = vpack.c.bf16 %v745, %v746
        %v754 = vpack.c.bf16 %v743, %v744
        %v755 = vpack.c.bf16 %v741, %v742
        %v756 = vpack.c.bf16 %v739, %v740
        %v757 = vpack.c.bf16 %v737, %v738
        %765 = vrot.lane.b32.xlu0 %v751, 64
        %v766 = vpop.permute.xlu0 %765
        %767 = vrot.lane.b32.xlu0 %v752, 64
        %v768 = vpop.permute.xlu0 %767
        %769 = vrot.lane.b32.xlu0 %v753, 64
        %v770 = vpop.permute.xlu0 %769
        %771 = vrot.lane.b32.xlu0 %v754, 64
        %v772 = vpop.permute.xlu0 %771
        %773 = vrot.lane.b32.xlu0 %v755, 64
        %v774 = vpop.permute.xlu0 %773
        %775 = vrot.lane.b32.xlu0 %v756, 64
        %v776 = vpop.permute.xlu0 %775
        %777 = vrot.lane.b32.xlu0 %v757, 64
        %v778 = vpop.permute.xlu0 %777
        %vm786 = vcmask 785920
        %787 = vst.msk [vmem:[#allocation4] sm:$0xff] %vm786, %v766
        %788 = vst.msk [vmem:[#allocation4 + $0x18] sm:$0xff] %vm786, %v768
        %789 = vst.msk [vmem:[#allocation4 + $0x30] sm:$0xff] %vm786, %v770
        %790 = vst.msk [vmem:[#allocation4 + $0x48] sm:$0xff] %vm786, %v772
        %791 = vst.msk [vmem:[#allocation4 + $0x60] sm:$0xff] %vm786, %v774
        %792 = vst.msk [vmem:[#allocation4 + $0x78] sm:$0xff] %vm786, %v776
        %793 = vst.msk [vmem:[#allocation4 + $0x90] sm:$0xff] %vm786, %v778
        %v794 = vpack.c.bf16 %v628, %v627
        %802 = vrot.lane.b32.xlu0 %v632, 96
        %v803 = vpop.permute.xlu0 %802
        %804 = vrot.lane.b32.xlu0 %v633, 96
        %v805 = vpop.permute.xlu0 %804
        %806 = vrot.lane.b32.xlu0 %v634, 96
        %v807 = vpop.permute.xlu0 %806
        %808 = vrot.lane.b32.xlu0 %v635, 96
        %v809 = vpop.permute.xlu0 %808
        %810 = vrot.lane.b32.xlu0 %v636, 96
        %v811 = vpop.permute.xlu0 %810
        %812 = vrot.lane.b32.xlu0 %v637, 96
        %v813 = vpop.permute.xlu0 %812
        %814 = vrot.lane.b32.xlu0 %v794, 96
        %v815 = vpop.permute.xlu0 %814
        %vm823 = vcmask 1048320
        %824 = vst.msk [vmem:[#allocation4] sm:$0xff] %vm823, %v803
        %825 = vst.msk [vmem:[#allocation4 + $0x18] sm:$0xff] %vm823, %v805
        %826 = vst.msk [vmem:[#allocation4 + $0x30] sm:$0xff] %vm823, %v807
        %827 = vst.msk [vmem:[#allocation4 + $0x48] sm:$0xff] %vm823, %v809
        %828 = vst.msk [vmem:[#allocation4 + $0x60] sm:$0xff] %vm823, %v811
        %829 = vst.msk [vmem:[#allocation4 + $0x78] sm:$0xff] %vm823, %v813
        %830 = vst.msk [vmem:[#allocation4 + $0x90] sm:$0xff] %vm823, %v815
        %v831 = vrot.slane %v628, 1
        %v832 = vrot.slane %v629, 1
        %v833 = vsel %vm663, %v831, %v832
        %v834 = vsel %vm663, %v660, %v831
        %v835 = vpack.c.bf16 %v833, %v834
        %836 = vst.msk [vmem:[#allocation4 + $0x8] sm:$0xff] %vm638, %v679
        %837 = vst.msk [vmem:[#allocation4 + $0x20] sm:$0xff] %vm638, %v680
        %838 = vst.msk [vmem:[#allocation4 + $0x38] sm:$0xff] %vm638, %v681
        %839 = vst.msk [vmem:[#allocation4 + $0x50] sm:$0xff] %vm638, %v682
        %840 = vst.msk [vmem:[#allocation4 + $0x68] sm:$0xff] %vm638, %v683
        %841 = vst.msk [vmem:[#allocation4 + $0x80] sm:$0xff] %vm638, %v684
        %842 = vst.msk [vmem:[#allocation4 + $0x98] sm:$0xff] %vm638, %v835
        %v843 = vrot.slane %v628, 2
        %v844 = vrot.slane %v629, 2
        %v845 = vsel %vm736, %v843, %v844
        %v846 = vsel %vm736, %v735, %v843
        %v847 = vpack.c.bf16 %v845, %v846
        %849 = vrot.lane.b32.xlu0 %v752, 32
        %v850 = vpop.permute.xlu0 %849
        %851 = vrot.lane.b32.xlu0 %v753, 32
        %v852 = vpop.permute.xlu0 %851
        %853 = vrot.lane.b32.xlu0 %v754, 32
        %v854 = vpop.permute.xlu0 %853
        %855 = vrot.lane.b32.xlu0 %v755, 32
        %v856 = vpop.permute.xlu0 %855
        %857 = vrot.lane.b32.xlu0 %v756, 32
        %v858 = vpop.permute.xlu0 %857
        %859 = vrot.lane.b32.xlu0 %v757, 32
        %v860 = vpop.permute.xlu0 %859
        %861 = vrot.lane.b32.xlu0 %v847, 32
        %v862 = vpop.permute.xlu0 %861
        %870 = vst.msk [vmem:[#allocation4 + $0x8] sm:$0xff] %vm713, %v850
        %871 = vst.msk [vmem:[#allocation4 + $0x20] sm:$0xff] %vm713, %v852
        %872 = vst.msk [vmem:[#allocation4 + $0x38] sm:$0xff] %vm713, %v854
        %873 = vst.msk [vmem:[#allocation4 + $0x50] sm:$0xff] %vm713, %v856
        %874 = vst.msk [vmem:[#allocation4 + $0x68] sm:$0xff] %vm713, %v858
        %875 = vst.msk [vmem:[#allocation4 + $0x80] sm:$0xff] %vm713, %v860
        %876 = vst.msk [vmem:[#allocation4 + $0x98] sm:$0xff] %vm713, %v862
        %v877 = vpack.c.bf16 %v630, %v629
        %879 = vrot.lane.b32.xlu0 %v633, 64
        %v880 = vpop.permute.xlu0 %879
        %881 = vrot.lane.b32.xlu0 %v634, 64
        %v882 = vpop.permute.xlu0 %881
        %883 = vrot.lane.b32.xlu0 %v635, 64
        %v884 = vpop.permute.xlu0 %883
        %885 = vrot.lane.b32.xlu0 %v636, 64
        %v886 = vpop.permute.xlu0 %885
        %887 = vrot.lane.b32.xlu0 %v637, 64
        %v888 = vpop.permute.xlu0 %887
        %889 = vrot.lane.b32.xlu0 %v794, 64
        %v890 = vpop.permute.xlu0 %889
        %891 = vrot.lane.b32.xlu0 %v877, 64
        %v892 = vpop.permute.xlu0 %891
        %900 = vst.msk [vmem:[#allocation4 + $0x8] sm:$0xff] %vm786, %v880
        %901 = vst.msk [vmem:[#allocation4 + $0x20] sm:$0xff] %vm786, %v882
        %902 = vst.msk [vmem:[#allocation4 + $0x38] sm:$0xff] %vm786, %v884
        %903 = vst.msk [vmem:[#allocation4 + $0x50] sm:$0xff] %vm786, %v886
        %904 = vst.msk [vmem:[#allocation4 + $0x68] sm:$0xff] %vm786, %v888
        %905 = vst.msk [vmem:[#allocation4 + $0x80] sm:$0xff] %vm786, %v890
        %906 = vst.msk [vmem:[#allocation4 + $0x98] sm:$0xff] %vm786, %v892
        %v907 = vrot.slane %v630, 1
        %v908 = vsel %vm663, %v832, %v907
        %v909 = vsel %vm663, %v907, %v646
        %v910 = vpack.c.bf16 %v909, %v908
        %913 = vrot.lane.b32.xlu0 %v680, 96
        %v914 = vpop.permute.xlu0 %913
        %915 = vrot.lane.b32.xlu0 %v681, 96
        %v916 = vpop.permute.xlu0 %915
        %917 = vrot.lane.b32.xlu0 %v682, 96
        %v918 = vpop.permute.xlu0 %917
        %919 = vrot.lane.b32.xlu0 %v683, 96
        %v920 = vpop.permute.xlu0 %919
        %921 = vrot.lane.b32.xlu0 %v684, 96
        %v922 = vpop.permute.xlu0 %921
        %923 = vrot.lane.b32.xlu0 %v835, 96
        %v924 = vpop.permute.xlu0 %923
        %925 = vrot.lane.b32.xlu0 %v910, 96
        %v926 = vpop.permute.xlu0 %925
        %934 = vst.msk [vmem:[#allocation4 + $0x8] sm:$0xff] %vm823, %v914
        %935 = vst.msk [vmem:[#allocation4 + $0x20] sm:$0xff] %vm823, %v916
        %936 = vst.msk [vmem:[#allocation4 + $0x38] sm:$0xff] %vm823, %v918
        %937 = vst.msk [vmem:[#allocation4 + $0x50] sm:$0xff] %vm823, %v920
        %938 = vst.msk [vmem:[#allocation4 + $0x68] sm:$0xff] %vm823, %v922
        %939 = vst.msk [vmem:[#allocation4 + $0x80] sm:$0xff] %vm823, %v924
        %940 = vst.msk [vmem:[#allocation4 + $0x98] sm:$0xff] %vm823, %v926
        %v941 = vrot.slane %v630, 2
        %v942 = vsel %vm736, %v844, %v941
        %v943 = vsel %vm736, %v941, %v721
        %v944 = vpack.c.bf16 %v943, %v942
        %945 = vst.msk [vmem:[#allocation4 + $0x10] sm:$0xff] %vm638, %v753
        %946 = vst.msk [vmem:[#allocation4 + $0x28] sm:$0xff] %vm638, %v754
        %947 = vst.msk [vmem:[#allocation4 + $0x40] sm:$0xff] %vm638, %v755
        %948 = vst.msk [vmem:[#allocation4 + $0x58] sm:$0xff] %vm638, %v756
        %949 = vst.msk [vmem:[#allocation4 + $0x70] sm:$0xff] %vm638, %v757
        %950 = vst.msk [vmem:[#allocation4 + $0x88] sm:$0xff] %vm638, %v847
        %951 = vst.msk [vmem:[#allocation4 + $0xa0] sm:$0xff] %vm638, %v944
        %v952 = vld [vmem:[#allocation4] sm:$0xff]
        %v953 = vld [vmem:[#allocation4 + $0x8] sm:$0xff]
        %v954 = vld [vmem:[#allocation4 + $0x10] sm:$0xff]
        %v955 = vld [vmem:[#allocation4 + $0x18] sm:$0xff]
        %v956 = vld [vmem:[#allocation4 + $0x20] sm:$0xff]
        %v957 = vld [vmem:[#allocation4 + $0x28] sm:$0xff]
        %v958 = vld [vmem:[#allocation4 + $0x30] sm:$0xff]
        %v959 = vld [vmem:[#allocation4 + $0x38] sm:$0xff]
        %v960 = vld [vmem:[#allocation4 + $0x40] sm:$0xff]
        %v961 = vld [vmem:[#allocation4 + $0x48] sm:$0xff]
        %v962 = vld [vmem:[#allocation4 + $0x50] sm:$0xff]
        %v963 = vld [vmem:[#allocation4 + $0x58] sm:$0xff]
        %v964 = vld [vmem:[#allocation4 + $0x60] sm:$0xff]
        %v965 = vld [vmem:[#allocation4 + $0x68] sm:$0xff]
        %v966 = vld [vmem:[#allocation4 + $0x70] sm:$0xff]
        %v967 = vld [vmem:[#allocation4 + $0x78] sm:$0xff]
        %v968 = vld [vmem:[#allocation4 + $0x80] sm:$0xff]
        %v969 = vld [vmem:[#allocation4 + $0x88] sm:$0xff]
        %v970 = vld [vmem:[#allocation4 + $0x90] sm:$0xff]
        %v971 = vld [vmem:[#allocation4 + $0x98] sm:$0xff]
        %v972 = vld [vmem:[#allocation4 + $0xa0] sm:$0xff]
        %v973 = vld [vmem:[%s3] sm:$0xf]
        %v974 = vld [vmem:[%s3 + $0x4] sm:$0xf]
        %v975 = vld [vmem:[%s3 + $0x8] sm:$0xf]
        %v976 = vld [vmem:[%s3 + $0xc] sm:$0xf]
        %v977 = vld [vmem:[%s3 + $0x10] sm:$0xf]
        %v978 = vld [vmem:[%s3 + $0x14] sm:$0xf]
        %v979 = vld [vmem:[%s3 + $0x18] sm:$0xf]
        %v980 = vld [vmem:[%s3 + $0x1c] sm:$0xf]
        %v981 = vld [vmem:[%s3 + $0x20] sm:$0xf]
        %v982 = vld [vmem:[%s3 + $0x24] sm:$0xf]
        %v983 = vld [vmem:[%s3 + $0x28] sm:$0xf]
        %v984 = vld [vmem:[%s3 + $0x2c] sm:$0xf]
        %v985 = vld [vmem:[%s3 + $0x30] sm:$0xf]
        %v986 = vld [vmem:[%s3 + $0x34] sm:$0xf]
        %v987 = vld [vmem:[%s3 + $0x38] sm:$0xf]
        %v988 = vld [vmem:[%s3 + $0x3c] sm:$0xf]
        %v989 = vld [vmem:[%s3 + $0x40] sm:$0xf]
        %v990 = vld [vmem:[%s3 + $0x44] sm:$0xf]
        %v991 = vld [vmem:[%s3 + $0x48] sm:$0xf]
        %v992 = vld [vmem:[%s3 + $0x4c] sm:$0xf]
        %v993 = vld [vmem:[%s3 + $0x50] sm:$0xf]
        %v994 = vld [vmem:[%s3 + $0x54] sm:$0xf]
        %v995 = vld [vmem:[%s3 + $0x58] sm:$0xf]
        %v996 = vld [vmem:[%s3 + $0x5c] sm:$0xf]
        %v997 = vld [vmem:[%s3 + $0x60] sm:$0xf]
        %v998 = vld [vmem:[%s3 + $0x64] sm:$0xf]
        %v999 = vld [vmem:[%s3 + $0x68] sm:$0xf]
        %v1000 = vld [vmem:[%s3 + $0x6c] sm:$0xf]
        %v1001 = vld [vmem:[%s3 + $0x70] sm:$0xf]
        %v1002 = vld [vmem:[%s3 + $0x74] sm:$0xf]
        %v1003 = vld [vmem:[%s3 + $0x78] sm:$0xf]
        %v1004 = vld [vmem:[%s3 + $0x7c] sm:$0xf]
        %v1005 = vld [vmem:[%s3 + $0x80] sm:$0xf]
        %v1006 = vld [vmem:[%s3 + $0x84] sm:$0xf]
        %v1007 = vld [vmem:[%s3 + $0x88] sm:$0xf]
        %v1008 = vld [vmem:[%s3 + $0x8c] sm:$0xf]
        %v1009 = vld [vmem:[%s4] sm:$0x1]
        %v1011 = vlaneseq
        %v1012 = vshrl.u32 %v1011, 7
        %v1013 = vsub.s32 0, %v1012
        %v1014 = vrot.slane %v1009, %v1013
        %v1052 = vunpack.c.l.b16 %v973
        %v1053 = vunpack.c.l.b16 %v974
        %v1054 = vunpack.c.l.b16 %v975
        %v1055 = vunpack.c.l.b16 %v976
        %v1056 = vunpack.c.l.b16 %v977
        %v1057 = vunpack.c.l.b16 %v978
        %v1058 = vunpack.c.l.b16 %v979
        %v1059 = vunpack.c.l.b16 %v980
        %v1060 = vunpack.c.l.b16 %v981
        %v1061 = vunpack.c.l.b16 %v982
        %v1062 = vunpack.c.l.b16 %v983
        %v1063 = vunpack.c.l.b16 %v984
        %v1064 = vunpack.c.l.b16 %v985
        %v1065 = vunpack.c.l.b16 %v986
        %v1066 = vunpack.c.l.b16 %v987
        %v1067 = vunpack.c.l.b16 %v988
        %v1068 = vunpack.c.l.b16 %v989
        %v1069 = vunpack.c.l.b16 %v990
        %v1070 = vunpack.c.l.b16 %v991
        %v1071 = vunpack.c.l.b16 %v992
        %v1072 = vunpack.c.l.b16 %v993
        %v1073 = vunpack.c.l.b16 %v994
        %v1074 = vunpack.c.l.b16 %v995
        %v1075 = vunpack.c.l.b16 %v996
        %v1076 = vunpack.c.l.b16 %v997
        %v1077 = vunpack.c.l.b16 %v998
        %v1078 = vunpack.c.l.b16 %v999
        %v1079 = vunpack.c.l.b16 %v1000
        %v1080 = vunpack.c.l.b16 %v1001
        %v1081 = vunpack.c.l.b16 %v1002
        %v1082 = vunpack.c.l.b16 %v1003
        %v1083 = vunpack.c.l.b16 %v1004
        %v1084 = vunpack.c.l.b16 %v1005
        %v1085 = vunpack.c.l.b16 %v1006
        %v1086 = vunpack.c.l.b16 %v1007
        %v1087 = vunpack.c.l.b16 %v1008
        %v1088 = vpack.c.b16 %v1053, %v1052
        %v1089 = vpack.c.b16 %v1055, %v1054
        %v1090 = vpack.c.b16 %v1057, %v1056
        %v1091 = vpack.c.b16 %v1059, %v1058
        %v1092 = vpack.c.b16 %v1061, %v1060
        %v1093 = vpack.c.b16 %v1063, %v1062
        %v1094 = vpack.c.b16 %v1065, %v1064
        %v1095 = vpack.c.b16 %v1067, %v1066
        %v1096 = vpack.c.b16 %v1069, %v1068
        %v1097 = vpack.c.b16 %v1071, %v1070
        %v1098 = vpack.c.b16 %v1073, %v1072
        %v1099 = vpack.c.b16 %v1075, %v1074
        %v1100 = vpack.c.b16 %v1077, %v1076
        %v1101 = vpack.c.b16 %v1079, %v1078
        %v1102 = vpack.c.b16 %v1081, %v1080
        %v1103 = vpack.c.b16 %v1083, %v1082
        %v1104 = vpack.c.b16 %v1085, %v1084
        %v1105 = vpack.c.b16 %v1087, %v1086
        %v1125 = vsel %vm638, %v954, 0
        %v1128 = vsel %vm638, %v957, 0
        %v1131 = vsel %vm638, %v960, 0
        %v1134 = vsel %vm638, %v963, 0
        %v1137 = vsel %vm638, %v966, 0
        %v1140 = vsel %vm638, %v969, 0
        %v1143 = vsel %vm638, %v972, 0
        %1145 = vmatprep.subr.bf16.mxu0 0
        %1146 = vmatpush1.bf16.msra.mxu0 %v1088
        %1147 = vmatprep.subr.bf16.mxu0 0
        %1148 = vmatpush1.bf16.msra.mxu0 %v1089
        %1149 = vmatprep.subr.bf16.mxu0 0
        %1150 = vmatpush1.bf16.msra.mxu0 %v1090
        %1151 = vmatprep.subr.bf16.mxu0 0
        %1152 = vmatpush1.bf16.msra.mxu0 %v1091
        %1153 = vmatprep.subr.bf16.mxu0 0
        %1154 = vmatpush1.bf16.msra.mxu0 %v1092
        %1155 = vmatprep.subr.bf16.mxu0 0
        %1156 = vmatpush1.bf16.msra.mxu0 %v1093
        %1157 = vmatprep.subr.bf16.mxu0 0
        %1158 = vmatpush1.bf16.msra.mxu0 %v1094
        %1159 = vmatprep.subr.bf16.mxu0 0
        %1160 = vmatpush1.bf16.msra.mxu0 %v1095
        %1161 = vmatprep.subr.bf16.mxu0 0
        %1162 = vmatpush1.bf16.msra.mxu0 %v1096
        %1163 = vmatprep.subr.bf16.mxu0 0
        %1164 = vmatpush1.bf16.msra.mxu0 %v1097
        %1165 = vmatprep.subr.bf16.mxu0 0
        %1166 = vmatpush1.bf16.msra.mxu0 %v1098
        %1167 = vmatprep.subr.bf16.mxu0 0
        %1168 = vmatpush1.bf16.msra.mxu0 %v1099
        %1169 = vmatprep.subr.bf16.mxu0 0
        %1170 = vmatpush1.bf16.msra.mxu0 %v1100
        %1171 = vmatprep.subr.bf16.mxu0 0
        %1172 = vmatpush1.bf16.msra.mxu0 %v1101
        %1173 = vmatprep.subr.bf16.mxu0 0
        %1174 = vmatpush1.bf16.msra.mxu0 %v1102
        %1175 = vmatprep.subr.bf16.mxu0 0
        %1176 = vmatpush1.bf16.msra.mxu0 %v1103
        %1177 = vmatprep.mubr.bf16.mxu0 %v953
        %1178 = vmatmul.mubr.bf16.gmra.mrb[0].mxu0 %v952
        %v1179 = vpop.f32.mrb[0].mxu0
        %v1180 = vadd.f32 %v1014, %v1179
        %v1181 = vpop.f32.mrb[0].mxu0
        %v1182 = vpop.f32.mrb[0].mxu0
        %v1183 = vadd.f32 %v1014, %v1182
        %v1184 = vpop.f32.mrb[0].mxu0
        %1185 = vmatprep.mubr.bf16.mxu0 %v956
        %1186 = vmatmul.mubr.bf16.gmra.mrb[0].mxu0 %v955
        %v1187 = vpop.f32.mrb[0].mxu0
        %v1188 = vadd.f32 %v1014, %v1187
        %v1189 = vpop.f32.mrb[0].mxu0
        %v1190 = vpop.f32.mrb[0].mxu0
        %v1191 = vadd.f32 %v1014, %v1190
        %v1192 = vpop.f32.mrb[0].mxu0
        %1193 = vmatprep.mubr.bf16.mxu0 %v959
        %1194 = vmatmul.mubr.bf16.gmra.mrb[0].mxu0 %v958
        %v1195 = vpop.f32.mrb[0].mxu0
        %v1196 = vadd.f32 %v1014, %v1195
        %v1197 = vpop.f32.mrb[0].mxu0
        %v1198 = vpop.f32.mrb[0].mxu0
        %v1199 = vadd.f32 %v1014, %v1198
        %v1200 = vpop.f32.mrb[0].mxu0
        %1201 = vmatprep.mubr.bf16.mxu0 %v962
        %1202 = vmatmul.mubr.bf16.gmra.mrb[0].mxu0 %v961
        %v1203 = vpop.f32.mrb[0].mxu0
        %v1204 = vadd.f32 %v1014, %v1203
        %v1205 = vpop.f32.mrb[0].mxu0
        %v1206 = vpop.f32.mrb[0].mxu0
        %v1207 = vadd.f32 %v1014, %v1206
        %v1208 = vpop.f32.mrb[0].mxu0
        %1209 = vmatprep.mubr.bf16.mxu0 %v965
        %1210 = vmatmul.mubr.bf16.gmra.mrb[0].mxu0 %v964
        %v1211 = vpop.f32.mrb[0].mxu0
        %v1212 = vadd.f32 %v1014, %v1211
        %v1213 = vpop.f32.mrb[0].mxu0
        %v1214 = vpop.f32.mrb[0].mxu0
        %v1215 = vadd.f32 %v1014, %v1214
        %v1216 = vpop.f32.mrb[0].mxu0
        %1217 = vmatprep.mubr.bf16.mxu0 %v968
        %1218 = vmatmul.mubr.bf16.gmra.mrb[0].mxu0 %v967
        %v1219 = vpop.f32.mrb[0].mxu0
        %v1220 = vadd.f32 %v1014, %v1219
        %v1221 = vpop.f32.mrb[0].mxu0
        %v1222 = vpop.f32.mrb[0].mxu0
        %v1223 = vadd.f32 %v1014, %v1222
        %v1224 = vpop.f32.mrb[0].mxu0
        %1225 = vmatprep.mubr.bf16.mxu0 %v971
        %1226 = vmatmul.mubr.bf16.gmra.mrb[0].mxu0 %v970
        %v1227 = vpop.f32.mrb[0].mxu0
        %v1228 = vadd.f32 %v1014, %v1227
        %v1229 = vpop.f32.mrb[0].mxu0
        %v1230 = vpop.f32.mrb[0].mxu0
        %v1231 = vadd.f32 %v1014, %v1230
        %v1232 = vpop.f32.mrb[0].mxu0
        %1233 = vdwg.mxu0
        %1234 = vmatprep.subr.bf16.mxu0 0
        %1235 = vmatpush1.bf16.msra.mxu0 %v1104
        %1236 = vmatprep.subr.bf16.mxu0 0
        %1237 = vmatpush1.bf16.msra.mxu0 %v1105
        %1238 = vmatprep.subr.bf16.mxu0 0
        %1239 = vmatpush1.bf16.msra.mxu0 0
        %1240 = vmatprep.subr.bf16.mxu0 0
        %1241 = vmatpush1.bf16.msra.mxu0 0
        %1242 = vmatprep.subr.bf16.mxu0 0
        %1243 = vmatpush1.bf16.msra.mxu0 0
        %1244 = vmatprep.subr.bf16.mxu0 0
        %1245 = vmatpush1.bf16.msra.mxu0 0
        %1246 = vmatprep.subr.bf16.mxu0 0
        %1247 = vmatpush1.bf16.msra.mxu0 0
        %1248 = vmatprep.subr.bf16.mxu0 0
        %1249 = vmatpush1.bf16.msra.mxu0 0
        %1250 = vmatprep.subr.bf16.mxu0 0
        %1251 = vmatpush1.bf16.msra.mxu0 0
        %1252 = vmatprep.subr.bf16.mxu0 0
        %1253 = vmatpush1.bf16.msra.mxu0 0
        %1254 = vmatprep.subr.bf16.mxu0 0
        %1255 = vmatpush1.bf16.msra.mxu0 0
        %1256 = vmatprep.subr.bf16.mxu0 0
        %1257 = vmatpush1.bf16.msra.mxu0 0
        %1258 = vmatprep.subr.bf16.mxu0 0
        %1259 = vmatpush1.bf16.msra.mxu0 0
        %1260 = vmatprep.subr.bf16.mxu0 0
        %1261 = vmatpush1.bf16.msra.mxu0 0
        %1262 = vmatprep.subr.bf16.mxu0 0
        %1263 = vmatpush1.bf16.msra.mxu0 0
        %1264 = vmatprep.subr.bf16.mxu0 0
        %1265 = vmatpush1.bf16.msra.mxu0 0
        %1266 = vmatprep.mubr.bf16.mxu0 0
        %1267 = vmatmul.mubr.bf16.gmra.mrb[0].mxu0 %v1125
        %v1268 = vpop.f32.mrb[0].mxu0
        %v1269 = vadd.f32 %v1180, %v1268
        %v1270 = vpop.f32.mrb[0].mxu0
        %v1271 = vpop.f32.mrb[0].mxu0
        %v1272 = vadd.f32 %v1183, %v1271
        %v1273 = vpop.f32.mrb[0].mxu0
        %1274 = vmatprep.mubr.bf16.mxu0 0
        %1275 = vmatmul.mubr.bf16.gmra.mrb[0].mxu0 %v1128
        %v1276 = vpop.f32.mrb[0].mxu0
        %v1277 = vadd.f32 %v1188, %v1276
        %v1278 = vpop.f32.mrb[0].mxu0
        %v1279 = vpop.f32.mrb[0].mxu0
        %v1280 = vadd.f32 %v1191, %v1279
        %v1281 = vpop.f32.mrb[0].mxu0
        %1282 = vmatprep.mubr.bf16.mxu0 0
        %1283 = vmatmul.mubr.bf16.gmra.mrb[0].mxu0 %v1131
        %v1284 = vpop.f32.mrb[0].mxu0
        %v1285 = vadd.f32 %v1196, %v1284
        %v1286 = vpop.f32.mrb[0].mxu0
        %v1287 = vpop.f32.mrb[0].mxu0
        %v1288 = vadd.f32 %v1199, %v1287
        %v1289 = vpop.f32.mrb[0].mxu0
        %1290 = vmatprep.mubr.bf16.mxu0 0
        %1291 = vmatmul.mubr.bf16.gmra.mrb[0].mxu0 %v1134
        %v1292 = vpop.f32.mrb[0].mxu0
        %v1293 = vadd.f32 %v1204, %v1292
        %v1294 = vpop.f32.mrb[0].mxu0
        %v1295 = vpop.f32.mrb[0].mxu0
        %v1296 = vadd.f32 %v1207, %v1295
        %v1297 = vpop.f32.mrb[0].mxu0
        %1298 = vmatprep.mubr.bf16.mxu0 0
        %1299 = vmatmul.mubr.bf16.gmra.mrb[0].mxu0 %v1137
        %v1300 = vpop.f32.mrb[0].mxu0
        %v1301 = vadd.f32 %v1212, %v1300
        %v1302 = vpop.f32.mrb[0].mxu0
        %v1303 = vpop.f32.mrb[0].mxu0
        %v1304 = vadd.f32 %v1215, %v1303
        %v1305 = vpop.f32.mrb[0].mxu0
        %1306 = vmatprep.mubr.bf16.mxu0 0
        %1307 = vmatmul.mubr.bf16.gmra.mrb[0].mxu0 %v1140
        %v1308 = vpop.f32.mrb[0].mxu0
        %v1309 = vadd.f32 %v1220, %v1308
        %v1310 = vpop.f32.mrb[0].mxu0
        %v1311 = vpop.f32.mrb[0].mxu0
        %v1312 = vadd.f32 %v1223, %v1311
        %v1313 = vpop.f32.mrb[0].mxu0
        %1314 = vmatprep.mubr.bf16.mxu0 0
        %1315 = vmatmul.mubr.bf16.gmra.mrb[0].mxu0 %v1143
        %v1316 = vpop.f32.mrb[0].mxu0
        %v1317 = vadd.f32 %v1228, %v1316
        %v1318 = vpop.f32.mrb[0].mxu0
        %v1319 = vpop.f32.mrb[0].mxu0
        %v1320 = vadd.f32 %v1231, %v1319
        %v1321 = vpop.f32.mrb[0].mxu0
        %1322 = vdwg.mxu0
        %v1323 = vmax.f32 %v1269, 0.0
        %v1324 = vmax.f32 %v1272, 0.0
        %v1325 = vmax.f32 %v1277, 0.0
        %v1326 = vmax.f32 %v1280, 0.0
        %v1327 = vmax.f32 %v1285, 0.0
        %v1328 = vmax.f32 %v1288, 0.0
        %v1329 = vmax.f32 %v1293, 0.0
        %v1330 = vmax.f32 %v1296, 0.0
        %v1331 = vmax.f32 %v1301, 0.0
        %v1332 = vmax.f32 %v1304, 0.0
        %v1333 = vmax.f32 %v1309, 0.0
        %v1334 = vmax.f32 %v1312, 0.0
        %v1335 = vmax.f32 %v1317, 0.0
        %v1336 = vmax.f32 %v1320, 0.0
        %v1337 = vpack.c.bf16 %v1324, %v1323
        %v1338 = vpack.c.bf16 %v1326, %v1325
        %v1339 = vpack.c.bf16 %v1328, %v1327
        %v1340 = vpack.c.bf16 %v1330, %v1329
        %v1341 = vpack.c.bf16 %v1332, %v1331
        %v1342 = vpack.c.bf16 %v1334, %v1333
        %v1343 = vpack.c.bf16 %v1336, %v1335
        %v1344 = vld [vmem:[%s5] sm:$0xf]
        %v1345 = vld [vmem:[%s5 + $0x4] sm:$0xf]
        %v1346 = vld [vmem:[%s5 + $0x8] sm:$0xf]
        %v1347 = vld [vmem:[%s5 + $0xc] sm:$0xf]
        %v1348 = vld [vmem:[%s6] sm:$0x1]
        %v1350 = vlaneseq
        %v1351 = vshrl.u32 %v1350, 7
        %v1352 = vsub.s32 0, %v1351
        %v1353 = vrot.slane %v1348, %v1352
        %v1359 = vunpack.c.l.b16 %v1344
        %v1360 = vunpack.c.l.b16 %v1345
        %v1361 = vunpack.c.l.b16 %v1346
        %v1362 = vunpack.c.l.b16 %v1347
        %v1363 = vpack.c.b16 %v1360, %v1359
        %v1364 = vpack.c.b16 %v1362, %v1361
        %v1368 = vsel %vm638, %v1337, 0
        %v1371 = vsel %vm638, %v1338, 0
        %v1374 = vsel %vm638, %v1339, 0
        %v1377 = vsel %vm638, %v1340, 0
        %v1380 = vsel %vm638, %v1341, 0
        %v1383 = vsel %vm638, %v1342, 0
        %v1386 = vsel %vm638, %v1343, 0
        %1388 = vmatprep.subr.bf16.mxu0 0
        %1389 = vmatpush1.bf16.msra.mxu0 %v1363
        %1390 = vmatprep.subr.bf16.mxu0 0
        %1391 = vmatpush1.bf16.msra.mxu0 %v1364
        %1392 = vmatprep.subr.bf16.mxu0 0
        %1393 = vmatpush1.bf16.msra.mxu0 0
        %1394 = vmatprep.subr.bf16.mxu0 0
        %1395 = vmatpush1.bf16.msra.mxu0 0
        %1396 = vmatprep.subr.bf16.mxu0 0
        %1397 = vmatpush1.bf16.msra.mxu0 0
        %1398 = vmatprep.subr.bf16.mxu0 0
        %1399 = vmatpush1.bf16.msra.mxu0 0
        %1400 = vmatprep.subr.bf16.mxu0 0
        %1401 = vmatpush1.bf16.msra.mxu0 0
        %1402 = vmatprep.subr.bf16.mxu0 0
        %1403 = vmatpush1.bf16.msra.mxu0 0
        %1404 = vmatprep.subr.bf16.mxu0 0
        %1405 = vmatpush1.bf16.msra.mxu0 0
        %1406 = vmatprep.subr.bf16.mxu0 0
        %1407 = vmatpush1.bf16.msra.mxu0 0
        %1408 = vmatprep.subr.bf16.mxu0 0
        %1409 = vmatpush1.bf16.msra.mxu0 0
        %1410 = vmatprep.subr.bf16.mxu0 0
        %1411 = vmatpush1.bf16.msra.mxu0 0
        %1412 = vmatprep.subr.bf16.mxu0 0
        %1413 = vmatpush1.bf16.msra.mxu0 0
        %1414 = vmatprep.subr.bf16.mxu0 0
        %1415 = vmatpush1.bf16.msra.mxu0 0
        %1416 = vmatprep.subr.bf16.mxu0 0
        %1417 = vmatpush1.bf16.msra.mxu0 0
        %1418 = vmatprep.subr.bf16.mxu0 0
        %1419 = vmatpush1.bf16.msra.mxu0 0
        %1420 = vmatprep.mubr.bf16.mxu0 0
        %1421 = vmatmul.mubr.bf16.gmra.mrb[0].mxu0 %v1368
        %v1422 = vpop.f32.mrb[0].mxu0
        %v1423 = vadd.f32 %v1353, %v1422
        %v1424 = vpop.f32.mrb[0].mxu0
        %v1425 = vpop.f32.mrb[0].mxu0
        %v1426 = vadd.f32 %v1353, %v1425
        %v1427 = vpop.f32.mrb[0].mxu0
        %1428 = vmatprep.mubr.bf16.mxu0 0
        %1429 = vmatmul.mubr.bf16.gmra.mrb[0].mxu0 %v1371
        %v1430 = vpop.f32.mrb[0].mxu0
        %v1431 = vadd.f32 %v1353, %v1430
        %v1432 = vpop.f32.mrb[0].mxu0
        %v1433 = vpop.f32.mrb[0].mxu0
        %v1434 = vadd.f32 %v1353, %v1433
        %v1435 = vpop.f32.mrb[0].mxu0
        %1436 = vmatprep.mubr.bf16.mxu0 0
        %1437 = vmatmul.mubr.bf16.gmra.mrb[0].mxu0 %v1374
        %v1438 = vpop.f32.mrb[0].mxu0
        %v1439 = vadd.f32 %v1353, %v1438
        %v1440 = vpop.f32.mrb[0].mxu0
        %v1441 = vpop.f32.mrb[0].mxu0
        %v1442 = vadd.f32 %v1353, %v1441
        %v1443 = vpop.f32.mrb[0].mxu0
        %1444 = vmatprep.mubr.bf16.mxu0 0
        %1445 = vmatmul.mubr.bf16.gmra.mrb[0].mxu0 %v1377
        %v1446 = vpop.f32.mrb[0].mxu0
        %v1447 = vadd.f32 %v1353, %v1446
        %v1448 = vpop.f32.mrb[0].mxu0
        %v1449 = vpop.f32.mrb[0].mxu0
        %v1450 = vadd.f32 %v1353, %v1449
        %v1451 = vpop.f32.mrb[0].mxu0
        %1452 = vmatprep.mubr.bf16.mxu0 0
        %1453 = vmatmul.mubr.bf16.gmra.mrb[0].mxu0 %v1380
        %v1454 = vpop.f32.mrb[0].mxu0
        %v1455 = vadd.f32 %v1353, %v1454
        %v1456 = vpop.f32.mrb[0].mxu0
        %v1457 = vpop.f32.mrb[0].mxu0
        %v1458 = vadd.f32 %v1353, %v1457
        %v1459 = vpop.f32.mrb[0].mxu0
        %1460 = vmatprep.mubr.bf16.mxu0 0
        %1461 = vmatmul.mubr.bf16.gmra.mrb[0].mxu0 %v1383
        %v1462 = vpop.f32.mrb[0].mxu0
        %v1463 = vadd.f32 %v1353, %v1462
        %v1464 = vpop.f32.mrb[0].mxu0
        %v1465 = vpop.f32.mrb[0].mxu0
        %v1466 = vadd.f32 %v1353, %v1465
        %v1467 = vpop.f32.mrb[0].mxu0
        %1468 = vmatprep.mubr.bf16.mxu0 0
        %1469 = vmatmul.mubr.bf16.gmra.mrb[0].mxu0 %v1386
        %v1470 = vpop.f32.mrb[0].mxu0
        %v1471 = vadd.f32 %v1353, %v1470
        %v1472 = vpop.f32.mrb[0].mxu0
        %v1473 = vpop.f32.mrb[0].mxu0
        %v1474 = vadd.f32 %v1353, %v1473
        %v1475 = vpop.f32.mrb[0].mxu0
        %1476 = vdwg.mxu0
        %v1477 = vunpack.c.l.bf16 %v428
        %v1478 = vunpack.c.h.bf16 %v428
        %v1479 = vunpack.c.l.bf16 %v429
        %v1480 = vunpack.c.h.bf16 %v429
        %v1481 = vunpack.c.l.bf16 %v430
        %v1482 = vunpack.c.h.bf16 %v430
        %v1483 = vunpack.c.l.bf16 %v431
        %v1484 = vunpack.c.h.bf16 %v431
        %v1485 = vunpack.c.l.bf16 %v432
        %v1486 = vunpack.c.h.bf16 %v432
        %v1487 = vunpack.c.l.bf16 %v433
        %v1488 = vunpack.c.h.bf16 %v433
        %v1489 = vunpack.c.l.bf16 %v434
        %v1490 = vunpack.c.h.bf16 %v434
        %v1491 = vadd.f32 %v1423, %v1477
        %v1492 = vadd.f32 %v1426, %v1478
        %v1493 = vadd.f32 %v1431, %v1479
        %v1494 = vadd.f32 %v1434, %v1480
        %v1495 = vadd.f32 %v1439, %v1481
        %v1496 = vadd.f32 %v1442, %v1482
        %v1497 = vadd.f32 %v1447, %v1483
        %v1498 = vadd.f32 %v1450, %v1484
        %v1499 = vadd.f32 %v1455, %v1485
        %v1500 = vadd.f32 %v1458, %v1486
        %v1501 = vadd.f32 %v1463, %v1487
        %v1502 = vadd.f32 %v1466, %v1488
        %v1503 = vadd.f32 %v1471, %v1489
        %v1504 = vadd.f32 %v1474, %v1490
        %v1505 = vmax.f32 %v1491, 0.0
        %v1506 = vmax.f32 %v1492, 0.0
        %v1507 = vmax.f32 %v1493, 0.0
        %v1508 = vmax.f32 %v1494, 0.0
        %v1509 = vmax.f32 %v1495, 0.0
        %v1510 = vmax.f32 %v1496, 0.0
        %v1511 = vmax.f32 %v1497, 0.0
        %v1512 = vmax.f32 %v1498, 0.0
        %v1513 = vmax.f32 %v1499, 0.0
        %v1514 = vmax.f32 %v1500, 0.0
        %v1515 = vmax.f32 %v1501, 0.0
        %v1516 = vmax.f32 %v1502, 0.0
        %v1517 = vmax.f32 %v1503, 0.0
        %v1518 = vmax.f32 %v1504, 0.0
        %v1519 = vpack.c.bf16 %v1506, %v1505
        %v1520 = vpack.c.bf16 %v1508, %v1507
        %v1521 = vpack.c.bf16 %v1510, %v1509
        %v1522 = vpack.c.bf16 %v1512, %v1511
        %v1523 = vpack.c.bf16 %v1514, %v1513
        %v1524 = vpack.c.bf16 %v1516, %v1515
        %v1525 = vpack.c.bf16 %v1518, %v1517
        %v1533 = vunpack.c.l.b16 %v1519
        %v1534 = vunpack.c.h.b16 %v1519
        %v1535 = vunpack.c.l.b16 %v1520
        %v1536 = vunpack.c.h.b16 %v1520
        %v1537 = vunpack.c.l.b16 %v1521
        %v1538 = vunpack.c.h.b16 %v1521
        %v1539 = vunpack.c.l.b16 %v1522
        %v1540 = vunpack.c.h.b16 %v1522
        %v1541 = vunpack.c.l.b16 %v1523
        %v1542 = vunpack.c.h.b16 %v1523
        %v1543 = vunpack.c.l.b16 %v1524
        %v1544 = vunpack.c.h.b16 %v1524
        %v1545 = vunpack.c.l.b16 %v1525
        %v1546 = vunpack.c.h.b16 %v1525
        %v1547 = vpack.c.b16 %v1533, %v1533
        %v1548 = vpack.c.b16 %v1534, %v1534
        %v1549 = vpack.c.b16 %v1535, %v1535
        %v1550 = vpack.c.b16 %v1536, %v1536
        %v1551 = vpack.c.b16 %v1537, %v1537
        %v1552 = vpack.c.b16 %v1538, %v1538
        %v1553 = vpack.c.b16 %v1539, %v1539
        %v1554 = vpack.c.b16 %v1540, %v1540
        %v1555 = vpack.c.b16 %v1541, %v1541
        %v1556 = vpack.c.b16 %v1542, %v1542
        %v1557 = vpack.c.b16 %v1543, %v1543
        %v1558 = vpack.c.b16 %v1544, %v1544
        %v1559 = vpack.c.b16 %v1545, %v1545
        %v1560 = vpack.c.b16 %v1546, %v1546
        %1575 = vst [vmem:[%s255] sm:$0xf] %v1547
        %1576 = vst [vmem:[%s255 + $0x4] sm:$0xf] %v1548
        %1577 = vst [vmem:[%s255 + $0x8] sm:$0xf] %v1549
        %1578 = vst [vmem:[%s255 + $0xc] sm:$0xf] %v1550
        %1579 = vst [vmem:[%s255 + $0x10] sm:$0xf] %v1551
        %1580 = vst [vmem:[%s255 + $0x14] sm:$0xf] %v1552
        %1581 = vst [vmem:[%s255 + $0x18] sm:$0xf] %v1553
        %1582 = vst [vmem:[%s255 + $0x1c] sm:$0xf] %v1554
        %1583 = vst [vmem:[%s255 + $0x20] sm:$0xf] %v1555
        %1584 = vst [vmem:[%s255 + $0x24] sm:$0xf] %v1556
        %1585 = vst [vmem:[%s255 + $0x28] sm:$0xf] %v1557
        %1586 = vst [vmem:[%s255 + $0x2c] sm:$0xf] %v1558
        %1587 = vst [vmem:[%s255 + $0x30] sm:$0xf] %v1559
        %1588 = vst [vmem:[%s255 + $0x34] sm:$0xf] %v1560
        %s1589 = sand.u32 %s180, 1
        %s1590 = scalar_lea.sflag [#allocation6], %s1589
        %s1591 = sand.u32 %s180, 1
        %s1592 = smul.addr %s1591, 56
        %s1593 = scalar_lea.vmem [#allocation5], %s1592
        // Predicated region
        $region121: #{tpu_custom_call.1} parent=43 // pred_check
          %p1594 = pneg %p190
        $region122: #{tpu_custom_call.1} parent=43 // pred_check_branch
          %1596 = sbr.rel (%p1594) target = $region124
        $region123: #{tpu_custom_call.1} parent=43 // pred_region
          %s1597 = smul.u32 %s27, 2
          %s1598 = sadd.s32 %s1597, %s28
          %s1599 = smul.u32 14, %s1598
          %s1601 = ssub.s32 896, 896
          %1602 = vsyncadd %s1590, %s1601
          %s1603 = smul.addr %s26, 28
          %s1604 = sadd.s32 %s1599, %s1603
          %s1605 = smul.addr %s1604, 64
          %s1606 = scalar_lea.hbm %s7, %s1605
          %s1607 = sshll.u32 %s1593, 4
          %s1608 = int_to_ptr.vmem [resolvable:$true] %s1607
          %1613 = dma.vmem_to_hbm [thread:$0]  %s1608, 896, %s1606, %s1590, 64, 64, 4
        $region124: #{tpu_custom_call.1} parent=43 // pred_fallthru
          _
      $region44: #{tpu_custom_call.1} parent=5 // pred_fallthru
        _
      %p1614 = scmp.le.s32.totalorder 2, %s16
      // Predicated region
      $region125: #{tpu_custom_call.1} parent=5 // pred_check
        %p1615 = pneg %p1614
      $region126: #{tpu_custom_call.1} parent=5 // pred_check_branch
        %1617 = sbr.rel (%p1615) target = $region128
      $region127: #{tpu_custom_call.1} parent=5 // pred_region
        %s1618 = ssub.s32 %s16, 2
        // Predicated region
        $region129: #{tpu_custom_call.1} parent=127 // pred_check
          %p1619 = pneg %p196
        $region130: #{tpu_custom_call.1} parent=127 // pred_check_branch
          %1621 = sbr.rel (%p1619) target = $region132
        $region131: #{tpu_custom_call.1} parent=127 // pred_region
          %s1622 = sand.u32 %s181, 1
          %s1623 = scalar_lea.sflag [#allocation6], %s1622
          %s1624 = sand.u32 %s181, 1
          %s1625 = smul.addr %s1624, 56
          %s1626 = scalar_lea.vmem [#allocation5], %s1625
          %1627 = dma.done %s1623, 896
        $region132: #{tpu_custom_call.1} parent=127 // pred_fallthru
          _
      $region128: #{tpu_custom_call.1} parent=5 // pred_fallthru
        _
    $region6: #{tpu_custom_call.1} parent=1 // loop_footer
      %s20 = sadd.s32 1, %s16
    $region7: #{tpu_custom_call.1} parent=1 // loop_footer_branch
      %15 = sbr.rel target = $region3
    $region8: #{tpu_custom_call.1} parent=1 // loop_exit
      _
    %1628 = vsyncpa [#allocation6], 1
    %s1629 = scalar_lea.sflag [#allocation6], 1
    %1630 = vsyncpa %s1629, 1
  %1631 = vsyncmov [#allocation3]
  %s1632 = vpop.sfrf %1631
  %p1633 = scmp.eq.s32.totalorder %s1632, 0
  %p1634 = pneg %p1633
  %1636 = shalt.err (%p1634)
  %s1637 = scalar_lea.sflag [#allocation3], 1
  %1638 = vsyncmov %s1637
  %s1639 = vpop.sfrf %1638
  %p1640 = scmp.eq.s32.totalorder %s1639, 0
  %p1641 = pneg %p1640
  %1643 = shalt.err (%p1641)

</llo_original>
